<compile_context>
chip_gen: v7x
topology: tpu7x:2x2x1
jax: 0.10.0
libtpu: 0.0.40
codegen_flags: <defaults>
</compile_context>

<pallas_src>
import math

import jax
import jax.numpy as jnp
from jax.experimental import pallas as pl
from jax.experimental.pallas import tpu as pltpu

# ---- model hyper-parameters (globals, as in the PyTorch file) ----
d_model = 32
d_k = 8
d_v = 8
n_heads = 4
LN_EPS = 1e-5


# ----------------------------------------------------------------------------
# Single fused Pallas kernel: one grid step == one batch element.
# ----------------------------------------------------------------------------
def _mha_fused_kernel(
    q_in_ref, k_in_ref, v_in_ref, bias_ref,
    wq_ref, bq_ref, wk_ref, bk_ref, wv_ref, bv_ref,
    wo_ref, bo_ref, gamma_ref, beta_ref,
    o_ref, attn_ref,
):
    # q_in/k_in/v_in: (S, d_model)   bias: (S, S) additive mask (-1e9 where masked)
    # wq/wk: (d_model, H*d_k)  wv: (d_model, H*d_v)  wo: (H*d_v, d_model)
    # bq/bk/bv/bo/gamma/beta: (1, N)
    # o_ref: (S, d_model)   attn_ref: (H, S, S)
    q_in = q_in_ref[...]

    # Projections (W_Q already pre-scaled by 1/sqrt(d_k) in the wrapper).
    q = jnp.dot(q_in, wq_ref[...], preferred_element_type=jnp.float32) + bq_ref[...]
    k = jnp.dot(k_in_ref[...], wk_ref[...], preferred_element_type=jnp.float32) + bk_ref[...]
    v = jnp.dot(v_in_ref[...], wv_ref[...], preferred_element_type=jnp.float32) + bv_ref[...]

    bias = bias_ref[...]

    ctx_parts = []
    for h in range(n_heads):  # static unroll: H=4 tiny heads
        qh = q[:, h * d_k:(h + 1) * d_k]          # (S, d_k)
        kh = k[:, h * d_k:(h + 1) * d_k]          # (S, d_k)
        vh = v[:, h * d_v:(h + 1) * d_v]          # (S, d_v)

        # q @ k^T via contracting dims (no explicit transpose of k).
        score = jax.lax.dot_general(
            qh, kh, (((1,), (1,)), ((), ())),
            preferred_element_type=jnp.float32,
        ) + bias                                   # (S, S)

        # numerically-stable softmax along the key axis
        m = jnp.max(score, axis=-1, keepdims=True)
        e = jnp.exp(score - m)
        attn = e * pl.reciprocal(jnp.sum(e, axis=-1, keepdims=True), approx=True)

        attn_ref[h] = attn
        ctx_parts.append(
            jnp.dot(attn, vh, preferred_element_type=jnp.float32)  # (S, d_v)
        )

    # merge heads in-kernel: (S, H*d_v)
    ctx = jnp.concatenate(ctx_parts, axis=-1)

    # output projection + residual + LayerNorm
    out = jnp.dot(ctx, wo_ref[...], preferred_element_type=jnp.float32) + bo_ref[...]
    out = out + q_in
    mean = jnp.mean(out, axis=-1, keepdims=True)
    var = jnp.mean(jnp.square(out - mean), axis=-1, keepdims=True)
    xn = (out - mean) * jax.lax.rsqrt(var + LN_EPS)
    o_ref[...] = xn * gamma_ref[...] + beta_ref[...]


def multi_head_attention(params, Q, K, V, atten_mask):
    B, S, _ = Q.shape
    Hdk = n_heads * d_k
    Hdv = n_heads * d_v

    # Fold the 1/sqrt(d_k) attention scale into the query projection weights.
    scale = jnp.float32(1.0 / math.sqrt(d_k))
    wq = params["wq"] * scale
    bq = (params["bq"] * scale).reshape(1, Hdk)
    wk = params["wk"]
    bk = params["bk"].reshape(1, Hdk)
    wv = params["wv"]
    bv = params["bv"].reshape(1, Hdv)
    wo = params["wo"]
    bo = params["bo"].reshape(1, d_model)
    gamma = params["ln_gamma"].reshape(1, d_model)
    beta = params["ln_beta"].reshape(1, d_model)

    # Additive mask bias: -1e9 where masked, 0 elsewhere (cheaper than in-kernel select).
    mask_bias = atten_mask.astype(jnp.float32) * jnp.float32(-1e9)  # (B, S, S)

    rep2 = lambda b: (0, 0)  # replicated (weight / bias) blocks

    out, attn = pl.pallas_call(
        _mha_fused_kernel,
        out_shape=(
            jax.ShapeDtypeStruct((B, S, d_model), jnp.float32),
            jax.ShapeDtypeStruct((B, n_heads, S, S), jnp.float32),
        ),
        grid=(B,),
        in_specs=[
            pl.BlockSpec((None, S, d_model), lambda b: (b, 0, 0)),   # Q
            pl.BlockSpec((None, S, d_model), lambda b: (b, 0, 0)),   # K
            pl.BlockSpec((None, S, d_model), lambda b: (b, 0, 0)),   # V
            pl.BlockSpec((None, S, S), lambda b: (b, 0, 0)),         # mask bias
            pl.BlockSpec((d_model, Hdk), rep2),                      # wq (pre-scaled)
            pl.BlockSpec((1, Hdk), rep2),                            # bq
            pl.BlockSpec((d_model, Hdk), rep2),                      # wk
            pl.BlockSpec((1, Hdk), rep2),                            # bk
            pl.BlockSpec((d_model, Hdv), rep2),                      # wv
            pl.BlockSpec((1, Hdv), rep2),                            # bv
            pl.BlockSpec((Hdv, d_model), rep2),                      # wo
            pl.BlockSpec((1, d_model), rep2),                        # bo
            pl.BlockSpec((1, d_model), rep2),                        # gamma
            pl.BlockSpec((1, d_model), rep2),                        # beta
        ],
        out_specs=(
            pl.BlockSpec((None, S, d_model), lambda b: (b, 0, 0)),
            pl.BlockSpec((None, n_heads, S, S), lambda b: (b, 0, 0, 0)),
        ),
        compiler_params=pltpu.CompilerParams(
            dimension_semantics=("parallel",)  # lets v7x shard batch over 2 TCs
        ),
    )(Q, K, V, mask_bias, wq, bq, wk, bk, wv, bv, wo, bo, gamma, beta)
    return out, attn


# ----------------------------------------------------------------------------
# Pure-JAX reference (for correctness check)
# ----------------------------------------------------------------------------
def ref_multi_head_attention(params, Q, K, V, atten_mask):
    B, S, _ = Q.shape
    q = (Q @ params["wq"] + params["bq"]).reshape(B, S, n_heads, d_k).transpose(0, 2, 1, 3)
    k = (K @ params["wk"] + params["bk"]).reshape(B, S, n_heads, d_k).transpose(0, 2, 1, 3)
    v = (V @ params["wv"] + params["bv"]).reshape(B, S, n_heads, d_v).transpose(0, 2, 1, 3)
    score = jnp.einsum("bhqd,bhkd->bhqk", q, k) / math.sqrt(d_k)
    mask = atten_mask[:, None, :, :]
    score = jnp.where(mask, -1e9, score)
    attn = jax.nn.softmax(score, axis=-1)
    ctx = jnp.einsum("bhqk,bhkd->bhqd", attn, v)
    ctx = ctx.transpose(0, 2, 1, 3).reshape(B, S, n_heads * d_v)
    out = ctx @ params["wo"] + params["bo"] + Q
    mean = jnp.mean(out, axis=-1, keepdims=True)
    var = jnp.mean(jnp.square(out - mean), axis=-1, keepdims=True)
    out = (out - mean) / jnp.sqrt(var + LN_EPS)
    out = out * params["ln_gamma"] + params["ln_beta"]
    return out, attn


# ----------------------------------------------------------------------------
def init_params(key):
    ks = jax.random.split(key, 8)
    s = 0.1
    return {
        "wq": (jax.random.normal(ks[0], (d_model, n_heads * d_k)) * s).astype(jnp.float32),
        "bq": (jax.random.normal(ks[1], (n_heads * d_k,)) * s).astype(jnp.float32),
        "wk": (jax.random.normal(ks[2], (d_model, n_heads * d_k)) * s).astype(jnp.float32),
        "bk": (jax.random.normal(ks[3], (n_heads * d_k,)) * s).astype(jnp.float32),
        "wv": (jax.random.normal(ks[4], (d_model, n_heads * d_v)) * s).astype(jnp.float32),
        "bv": (jax.random.normal(ks[5], (n_heads * d_v,)) * s).astype(jnp.float32),
        "wo": (jax.random.normal(ks[6], (n_heads * d_v, d_model)) * s).astype(jnp.float32),
        "bo": (jax.random.normal(ks[7], (d_model,)) * s).astype(jnp.float32),
        "ln_gamma": jnp.ones((d_model,), jnp.float32),
        "ln_beta": jnp.zeros((d_model,), jnp.float32),
    }


if __name__ == "__main__":
    B, S = 2, 8
    key = jax.random.PRNGKey(0)
    kp, kq, kk, kv = jax.random.split(key, 4)

    params = init_params(kp)
    Q = jax.random.normal(kq, (B, S, d_model), dtype=jnp.float32)
    K = jax.random.normal(kk, (B, S, d_model), dtype=jnp.float32)
    V = jax.random.normal(kv, (B, S, d_model), dtype=jnp.float32)
    # padding-style mask: last two key positions are masked out (True == masked)
    atten_mask = jnp.zeros((B, S, S), dtype=jnp.bool_).at[:, :, S - 2:].set(True)

    out, attn = multi_head_attention(params, Q, K, V, atten_mask)
    out = jax.block_until_ready(out)
    attn = jax.block_until_ready(attn)

    ref_out, ref_attn = ref_multi_head_attention(params, Q, K, V, atten_mask)
    assert out.shape == (B, S, d_model) and attn.shape == (B, n_heads, S, S)
    # Tolerances relaxed slightly vs. exact-reciprocal version because the
    # softmax denominator uses the approximate EUP reciprocal (per perf review).
    assert jnp.allclose(out, ref_out, atol=2e-3, rtol=2e-3)
    assert jnp.allclose(attn, ref_attn, atol=2e-3, rtol=2e-3)

    print("KERNEL_OK")
</pallas_src>

<mosaic_0001>
module attributes {stable_mosaic.version = 11 : i64} {
  func.func @_mha_fused_kernel(%arg0: i32, %arg1: memref<1x8x32xf32, #tpu.memory_space<vmem>>, %arg2: memref<1x8x32xf32, #tpu.memory_space<vmem>>, %arg3: memref<1x8x32xf32, #tpu.memory_space<vmem>>, %arg4: memref<1x8x8xf32, #tpu.memory_space<vmem>>, %arg5: memref<32x32xf32, #tpu.memory_space<vmem>>, %arg6: memref<1x32xf32, #tpu.memory_space<vmem>>, %arg7: memref<32x32xf32, #tpu.memory_space<vmem>>, %arg8: memref<1x32xf32, #tpu.memory_space<vmem>>, %arg9: memref<32x32xf32, #tpu.memory_space<vmem>>, %arg10: memref<1x32xf32, #tpu.memory_space<vmem>>, %arg11: memref<32x32xf32, #tpu.memory_space<vmem>>, %arg12: memref<1x32xf32, #tpu.memory_space<vmem>>, %arg13: memref<1x32xf32, #tpu.memory_space<vmem>>, %arg14: memref<1x32xf32, #tpu.memory_space<vmem>>, %arg15: memref<1x8x32xf32, #tpu.memory_space<vmem>>, %arg16: memref<1x4x8x8xf32, #tpu.memory_space<vmem>>) attributes {dimension_semantics = [#tpu.dimension_semantics<parallel>], iteration_bounds = array<i64: 2>, scalar_prefetch = 0 : i64, scratch_operands = 0 : i64, tpu.core_type = #tpu.core_type<tc>, window_params = [{transform_indices = @transform_0, window_bounds = array<i64: 1, 8, 32>}, {transform_indices = @transform_1, window_bounds = array<i64: 1, 8, 32>}, {transform_indices = @transform_2, window_bounds = array<i64: 1, 8, 32>}, {transform_indices = @transform_3, window_bounds = array<i64: 1, 8, 8>}, {pipeline_mode = #tpu.pipeline_mode<synchronous>, transform_indices = @transform_4, window_bounds = array<i64: 32, 32>}, {pipeline_mode = #tpu.pipeline_mode<synchronous>, transform_indices = @transform_5, window_bounds = array<i64: 1, 32>}, {pipeline_mode = #tpu.pipeline_mode<synchronous>, transform_indices = @transform_6, window_bounds = array<i64: 32, 32>}, {pipeline_mode = #tpu.pipeline_mode<synchronous>, transform_indices = @transform_7, window_bounds = array<i64: 1, 32>}, {pipeline_mode = #tpu.pipeline_mode<synchronous>, transform_indices = @transform_8, window_bounds = array<i64: 32, 32>}, {pipeline_mode = #tpu.pipeline_mode<synchronous>, transform_indices = @transform_9, window_bounds = array<i64: 1, 32>}, {pipeline_mode = #tpu.pipeline_mode<synchronous>, transform_indices = @transform_10, window_bounds = array<i64: 32, 32>}, {pipeline_mode = #tpu.pipeline_mode<synchronous>, transform_indices = @transform_11, window_bounds = array<i64: 1, 32>}, {pipeline_mode = #tpu.pipeline_mode<synchronous>, transform_indices = @transform_12, window_bounds = array<i64: 1, 32>}, {pipeline_mode = #tpu.pipeline_mode<synchronous>, transform_indices = @transform_13, window_bounds = array<i64: 1, 32>}, {transform_indices = @transform_14, window_bounds = array<i64: 1, 8, 32>}, {transform_indices = @transform_15, window_bounds = array<i64: 1, 4, 8, 8>}]} {
    %c0 = arith.constant 0 : index
    %c0_0 = arith.constant 0 : index
    %c0_1 = arith.constant 0 : index
    %0 = vector.load %arg1[%c0, %c0_0, %c0_1] : memref<1x8x32xf32, #tpu.memory_space<vmem>>, vector<1x8x32xf32>
    %1 = vector.shape_cast %0 : vector<1x8x32xf32> to vector<8x32xf32>
    %c0_2 = arith.constant 0 : index
    %c0_3 = arith.constant 0 : index
    %2 = vector.load %arg5[%c0_2, %c0_3] : memref<32x32xf32, #tpu.memory_space<vmem>>, vector<32x32xf32>
    %cst = arith.constant dense<0.000000e+00> : vector<8x32xf32>
    %3 = tpu.matmul %1, %2, %cst {dimension_numbers = #tpu.dot_dimension_numbers<[1], [0], [0], [1], [0, 0, 1, 1], [], []>} : vector<8x32xf32>, vector<32x32xf32>, vector<8x32xf32> -> vector<8x32xf32>
    %c0_4 = arith.constant 0 : index
    %c0_5 = arith.constant 0 : index
    %4 = vector.load %arg6[%c0_4, %c0_5] : memref<1x32xf32, #tpu.memory_space<vmem>>, vector<1x32xf32>
    %5 = vector.broadcast %4 : vector<1x32xf32> to vector<8x32xf32>
    %6 = arith.addf %3, %5 : vector<8x32xf32>
    %c0_6 = arith.constant 0 : index
    %c0_7 = arith.constant 0 : index
    %c0_8 = arith.constant 0 : index
    %7 = vector.load %arg2[%c0_6, %c0_7, %c0_8] : memref<1x8x32xf32, #tpu.memory_space<vmem>>, vector<1x8x32xf32>
    %8 = vector.shape_cast %7 : vector<1x8x32xf32> to vector<8x32xf32>
    %c0_9 = arith.constant 0 : index
    %c0_10 = arith.constant 0 : index
    %9 = vector.load %arg7[%c0_9, %c0_10] : memref<32x32xf32, #tpu.memory_space<vmem>>, vector<32x32xf32>
    %cst_11 = arith.constant dense<0.000000e+00> : vector<8x32xf32>
    %10 = tpu.matmul %8, %9, %cst_11 {dimension_numbers = #tpu.dot_dimension_numbers<[1], [0], [0], [1], [0, 0, 1, 1], [], []>} : vector<8x32xf32>, vector<32x32xf32>, vector<8x32xf32> -> vector<8x32xf32>
    %c0_12 = arith.constant 0 : index
    %c0_13 = arith.constant 0 : index
    %11 = vector.load %arg8[%c0_12, %c0_13] : memref<1x32xf32, #tpu.memory_space<vmem>>, vector<1x32xf32>
    %12 = vector.broadcast %11 : vector<1x32xf32> to vector<8x32xf32>
    %13 = arith.addf %10, %12 : vector<8x32xf32>
    %c0_14 = arith.constant 0 : index
    %c0_15 = arith.constant 0 : index
    %c0_16 = arith.constant 0 : index
    %14 = vector.load %arg3[%c0_14, %c0_15, %c0_16] : memref<1x8x32xf32, #tpu.memory_space<vmem>>, vector<1x8x32xf32>
    %15 = vector.shape_cast %14 : vector<1x8x32xf32> to vector<8x32xf32>
    %c0_17 = arith.constant 0 : index
    %c0_18 = arith.constant 0 : index
    %16 = vector.load %arg9[%c0_17, %c0_18] : memref<32x32xf32, #tpu.memory_space<vmem>>, vector<32x32xf32>
    %cst_19 = arith.constant dense<0.000000e+00> : vector<8x32xf32>
    %17 = tpu.matmul %15, %16, %cst_19 {dimension_numbers = #tpu.dot_dimension_numbers<[1], [0], [0], [1], [0, 0, 1, 1], [], []>} : vector<8x32xf32>, vector<32x32xf32>, vector<8x32xf32> -> vector<8x32xf32>
    %c0_20 = arith.constant 0 : index
    %c0_21 = arith.constant 0 : index
    %18 = vector.load %arg10[%c0_20, %c0_21] : memref<1x32xf32, #tpu.memory_space<vmem>>, vector<1x32xf32>
    %19 = vector.broadcast %18 : vector<1x32xf32> to vector<8x32xf32>
    %20 = arith.addf %17, %19 : vector<8x32xf32>
    %c0_22 = arith.constant 0 : index
    %c0_23 = arith.constant 0 : index
    %c0_24 = arith.constant 0 : index
    %21 = vector.load %arg4[%c0_22, %c0_23, %c0_24] : memref<1x8x8xf32, #tpu.memory_space<vmem>>, vector<1x8x8xf32>
    %22 = vector.shape_cast %21 : vector<1x8x8xf32> to vector<8x8xf32>
    %23 = vector.extract_strided_slice %6 {offsets = [0, 0], sizes = [8, 8], strides = [1, 1]} : vector<8x32xf32> to vector<8x8xf32>
    %24 = vector.extract_strided_slice %13 {offsets = [0, 0], sizes = [8, 8], strides = [1, 1]} : vector<8x32xf32> to vector<8x8xf32>
    %25 = vector.extract_strided_slice %20 {offsets = [0, 0], sizes = [8, 8], strides = [1, 1]} : vector<8x32xf32> to vector<8x8xf32>
    %cst_25 = arith.constant dense<0.000000e+00> : vector<8x8xf32>
    %26 = tpu.matmul %23, %24, %cst_25 {dimension_numbers = #tpu.dot_dimension_numbers<[1], [1], [0], [0], [0, 0, 1, 0], [], []>} : vector<8x8xf32>, vector<8x8xf32>, vector<8x8xf32> -> vector<8x8xf32>
    %27 = arith.addf %26, %22 : vector<8x8xf32>
    %cst_26 = arith.constant dense<0xFF800000> : vector<8xf32>
    %28 = vector.multi_reduction <maximumf>, %27, %cst_26 [1] : vector<8x8xf32> to vector<8xf32>
    %29 = vector.shape_cast %28 : vector<8xf32> to vector<8x1xf32>
    %30 = vector.broadcast %29 : vector<8x1xf32> to vector<8x8xf32>
    %31 = arith.subf %27, %30 : vector<8x8xf32>
    %32 = math.exp %31 : vector<8x8xf32>
    %cst_27 = arith.constant dense<0.000000e+00> : vector<8xf32>
    %33 = vector.multi_reduction <add>, %32, %cst_27 [1] : vector<8x8xf32> to vector<8xf32>
    %34 = vector.shape_cast %33 : vector<8xf32> to vector<8x1xf32>
    %35 = tpu.reciprocal %34 {approx = true} : vector<8x1xf32> -> vector<8x1xf32>
    %36 = vector.broadcast %35 : vector<8x1xf32> to vector<8x8xf32>
    %37 = arith.mulf %32, %36 : vector<8x8xf32>
    %c0_28 = arith.constant 0 : index
    %c0_29 = arith.constant 0 : index
    %c0_30 = arith.constant 0 : index
    %c0_31 = arith.constant 0 : index
    %38 = vector.load %arg16[%c0_28, %c0_29, %c0_30, %c0_31] : memref<1x4x8x8xf32, #tpu.memory_space<vmem>>, vector<1x1x8x8xf32>
    %39 = vector.shape_cast %38 : vector<1x1x8x8xf32> to vector<8x8xf32>
    %40 = vector.shape_cast %37 : vector<8x8xf32> to vector<1x1x8x8xf32>
    tpu.vector_store %arg16[%c0_28, %c0_29, %c0_30, %c0_31], %40 {strides = array<i32>} : memref<1x4x8x8xf32, #tpu.memory_space<vmem>>, vector<1x1x8x8xf32>,
    %cst_32 = arith.constant dense<0.000000e+00> : vector<8x8xf32>
    %41 = tpu.matmul %37, %25, %cst_32 {dimension_numbers = #tpu.dot_dimension_numbers<[1], [0], [0], [1], [0, 0, 1, 1], [], []>} : vector<8x8xf32>, vector<8x8xf32>, vector<8x8xf32> -> vector<8x8xf32>
    %42 = vector.extract_strided_slice %6 {offsets = [0, 8], sizes = [8, 8], strides = [1, 1]} : vector<8x32xf32> to vector<8x8xf32>
    %43 = vector.extract_strided_slice %13 {offsets = [0, 8], sizes = [8, 8], strides = [1, 1]} : vector<8x32xf32> to vector<8x8xf32>
    %44 = vector.extract_strided_slice %20 {offsets = [0, 8], sizes = [8, 8], strides = [1, 1]} : vector<8x32xf32> to vector<8x8xf32>
    %cst_33 = arith.constant dense<0.000000e+00> : vector<8x8xf32>
    %45 = tpu.matmul %42, %43, %cst_33 {dimension_numbers = #tpu.dot_dimension_numbers<[1], [1], [0], [0], [0, 0, 1, 0], [], []>} : vector<8x8xf32>, vector<8x8xf32>, vector<8x8xf32> -> vector<8x8xf32>
    %46 = arith.addf %45, %22 : vector<8x8xf32>
    %cst_34 = arith.constant dense<0xFF800000> : vector<8xf32>
    %47 = vector.multi_reduction <maximumf>, %46, %cst_34 [1] : vector<8x8xf32> to vector<8xf32>
    %48 = vector.shape_cast %47 : vector<8xf32> to vector<8x1xf32>
    %49 = vector.broadcast %48 : vector<8x1xf32> to vector<8x8xf32>
    %50 = arith.subf %46, %49 : vector<8x8xf32>
    %51 = math.exp %50 : vector<8x8xf32>
    %cst_35 = arith.constant dense<0.000000e+00> : vector<8xf32>
    %52 = vector.multi_reduction <add>, %51, %cst_35 [1] : vector<8x8xf32> to vector<8xf32>
    %53 = vector.shape_cast %52 : vector<8xf32> to vector<8x1xf32>
    %54 = tpu.reciprocal %53 {approx = true} : vector<8x1xf32> -> vector<8x1xf32>
    %55 = vector.broadcast %54 : vector<8x1xf32> to vector<8x8xf32>
    %56 = arith.mulf %51, %55 : vector<8x8xf32>
    %c0_36 = arith.constant 0 : index
    %c1 = arith.constant 1 : index
    %c0_37 = arith.constant 0 : index
    %c0_38 = arith.constant 0 : index
    %57 = vector.load %arg16[%c0_36, %c1, %c0_37, %c0_38] : memref<1x4x8x8xf32, #tpu.memory_space<vmem>>, vector<1x1x8x8xf32>
    %58 = vector.shape_cast %57 : vector<1x1x8x8xf32> to vector<8x8xf32>
    %59 = vector.shape_cast %56 : vector<8x8xf32> to vector<1x1x8x8xf32>
    tpu.vector_store %arg16[%c0_36, %c1, %c0_37, %c0_38], %59 {strides = array<i32>} : memref<1x4x8x8xf32, #tpu.memory_space<vmem>>, vector<1x1x8x8xf32>,
    %cst_39 = arith.constant dense<0.000000e+00> : vector<8x8xf32>
    %60 = tpu.matmul %56, %44, %cst_39 {dimension_numbers = #tpu.dot_dimension_numbers<[1], [0], [0], [1], [0, 0, 1, 1], [], []>} : vector<8x8xf32>, vector<8x8xf32>, vector<8x8xf32> -> vector<8x8xf32>
    %61 = vector.extract_strided_slice %6 {offsets = [0, 16], sizes = [8, 8], strides = [1, 1]} : vector<8x32xf32> to vector<8x8xf32>
    %62 = vector.extract_strided_slice %13 {offsets = [0, 16], sizes = [8, 8], strides = [1, 1]} : vector<8x32xf32> to vector<8x8xf32>
    %63 = vector.extract_strided_slice %20 {offsets = [0, 16], sizes = [8, 8], strides = [1, 1]} : vector<8x32xf32> to vector<8x8xf32>
    %cst_40 = arith.constant dense<0.000000e+00> : vector<8x8xf32>
    %64 = tpu.matmul %61, %62, %cst_40 {dimension_numbers = #tpu.dot_dimension_numbers<[1], [1], [0], [0], [0, 0, 1, 0], [], []>} : vector<8x8xf32>, vector<8x8xf32>, vector<8x8xf32> -> vector<8x8xf32>
    %65 = arith.addf %64, %22 : vector<8x8xf32>
    %cst_41 = arith.constant dense<0xFF800000> : vector<8xf32>
    %66 = vector.multi_reduction <maximumf>, %65, %cst_41 [1] : vector<8x8xf32> to vector<8xf32>
    %67 = vector.shape_cast %66 : vector<8xf32> to vector<8x1xf32>
    %68 = vector.broadcast %67 : vector<8x1xf32> to vector<8x8xf32>
    %69 = arith.subf %65, %68 : vector<8x8xf32>
    %70 = math.exp %69 : vector<8x8xf32>
    %cst_42 = arith.constant dense<0.000000e+00> : vector<8xf32>
    %71 = vector.multi_reduction <add>, %70, %cst_42 [1] : vector<8x8xf32> to vector<8xf32>
    %72 = vector.shape_cast %71 : vector<8xf32> to vector<8x1xf32>
    %73 = tpu.reciprocal %72 {approx = true} : vector<8x1xf32> -> vector<8x1xf32>
    %74 = vector.broadcast %73 : vector<8x1xf32> to vector<8x8xf32>
    %75 = arith.mulf %70, %74 : vector<8x8xf32>
    %c0_43 = arith.constant 0 : index
    %c2 = arith.constant 2 : index
    %c0_44 = arith.constant 0 : index
    %c0_45 = arith.constant 0 : index
    %76 = vector.load %arg16[%c0_43, %c2, %c0_44, %c0_45] : memref<1x4x8x8xf32, #tpu.memory_space<vmem>>, vector<1x1x8x8xf32>
    %77 = vector.shape_cast %76 : vector<1x1x8x8xf32> to vector<8x8xf32>
    %78 = vector.shape_cast %75 : vector<8x8xf32> to vector<1x1x8x8xf32>
    tpu.vector_store %arg16[%c0_43, %c2, %c0_44, %c0_45], %78 {strides = array<i32>} : memref<1x4x8x8xf32, #tpu.memory_space<vmem>>, vector<1x1x8x8xf32>,
    %cst_46 = arith.constant dense<0.000000e+00> : vector<8x8xf32>
    %79 = tpu.matmul %75, %63, %cst_46 {dimension_numbers = #tpu.dot_dimension_numbers<[1], [0], [0], [1], [0, 0, 1, 1], [], []>} : vector<8x8xf32>, vector<8x8xf32>, vector<8x8xf32> -> vector<8x8xf32>
    %80 = vector.extract_strided_slice %6 {offsets = [0, 24], sizes = [8, 8], strides = [1, 1]} : vector<8x32xf32> to vector<8x8xf32>
    %81 = vector.extract_strided_slice %13 {offsets = [0, 24], sizes = [8, 8], strides = [1, 1]} : vector<8x32xf32> to vector<8x8xf32>
    %82 = vector.extract_strided_slice %20 {offsets = [0, 24], sizes = [8, 8], strides = [1, 1]} : vector<8x32xf32> to vector<8x8xf32>
    %cst_47 = arith.constant dense<0.000000e+00> : vector<8x8xf32>
    %83 = tpu.matmul %80, %81, %cst_47 {dimension_numbers = #tpu.dot_dimension_numbers<[1], [1], [0], [0], [0, 0, 1, 0], [], []>} : vector<8x8xf32>, vector<8x8xf32>, vector<8x8xf32> -> vector<8x8xf32>
    %84 = arith.addf %83, %22 : vector<8x8xf32>
    %cst_48 = arith.constant dense<0xFF800000> : vector<8xf32>
    %85 = vector.multi_reduction <maximumf>, %84, %cst_48 [1] : vector<8x8xf32> to vector<8xf32>
    %86 = vector.shape_cast %85 : vector<8xf32> to vector<8x1xf32>
    %87 = vector.broadcast %86 : vector<8x1xf32> to vector<8x8xf32>
    %88 = arith.subf %84, %87 : vector<8x8xf32>
    %89 = math.exp %88 : vector<8x8xf32>
    %cst_49 = arith.constant dense<0.000000e+00> : vector<8xf32>
    %90 = vector.multi_reduction <add>, %89, %cst_49 [1] : vector<8x8xf32> to vector<8xf32>
    %91 = vector.shape_cast %90 : vector<8xf32> to vector<8x1xf32>
    %92 = tpu.reciprocal %91 {approx = true} : vector<8x1xf32> -> vector<8x1xf32>
    %93 = vector.broadcast %92 : vector<8x1xf32> to vector<8x8xf32>
    %94 = arith.mulf %89, %93 : vector<8x8xf32>
    %c0_50 = arith.constant 0 : index
    %c3 = arith.constant 3 : index
    %c0_51 = arith.constant 0 : index
    %c0_52 = arith.constant 0 : index
    %95 = vector.load %arg16[%c0_50, %c3, %c0_51, %c0_52] : memref<1x4x8x8xf32, #tpu.memory_space<vmem>>, vector<1x1x8x8xf32>
    %96 = vector.shape_cast %95 : vector<1x1x8x8xf32> to vector<8x8xf32>
    %97 = vector.shape_cast %94 : vector<8x8xf32> to vector<1x1x8x8xf32>
    tpu.vector_store %arg16[%c0_50, %c3, %c0_51, %c0_52], %97 {strides = array<i32>} : memref<1x4x8x8xf32, #tpu.memory_space<vmem>>, vector<1x1x8x8xf32>,
    %cst_53 = arith.constant dense<0.000000e+00> : vector<8x8xf32>
    %98 = tpu.matmul %94, %82, %cst_53 {dimension_numbers = #tpu.dot_dimension_numbers<[1], [0], [0], [1], [0, 0, 1, 1], [], []>} : vector<8x8xf32>, vector<8x8xf32>, vector<8x8xf32> -> vector<8x8xf32>
    %99 = tpu.concatenate %41, %60, %79, %98 in 1 : vector<8x8xf32>, vector<8x8xf32>, vector<8x8xf32>, vector<8x8xf32> -> vector<8x32xf32>
    %c0_54 = arith.constant 0 : index
    %c0_55 = arith.constant 0 : index
    %100 = vector.load %arg11[%c0_54, %c0_55] : memref<32x32xf32, #tpu.memory_space<vmem>>, vector<32x32xf32>
    %cst_56 = arith.constant dense<0.000000e+00> : vector<8x32xf32>
    %101 = tpu.matmul %99, %100, %cst_56 {dimension_numbers = #tpu.dot_dimension_numbers<[1], [0], [0], [1], [0, 0, 1, 1], [], []>} : vector<8x32xf32>, vector<32x32xf32>, vector<8x32xf32> -> vector<8x32xf32>
    %c0_57 = arith.constant 0 : index
    %c0_58 = arith.constant 0 : index
    %102 = vector.load %arg12[%c0_57, %c0_58] : memref<1x32xf32, #tpu.memory_space<vmem>>, vector<1x32xf32>
    %103 = vector.broadcast %102 : vector<1x32xf32> to vector<8x32xf32>
    %104 = arith.addf %101, %103 : vector<8x32xf32>
    %105 = arith.addf %104, %1 : vector<8x32xf32>
    %cst_59 = arith.constant dense<0.000000e+00> : vector<8xf32>
    %106 = vector.multi_reduction <add>, %105, %cst_59 [1] : vector<8x32xf32> to vector<8xf32>
    %107 = vector.shape_cast %106 : vector<8xf32> to vector<8x1xf32>
    %cst_60 = arith.constant 3.200000e+01 : f32
    %108 = vector.broadcast %cst_60 : f32 to vector<8x1xf32>
    %109 = arith.divf %107, %108 : vector<8x1xf32>
    %110 = vector.broadcast %109 : vector<8x1xf32> to vector<8x32xf32>
    %111 = arith.subf %105, %110 : vector<8x32xf32>
    %112 = arith.mulf %111, %111 : vector<8x32xf32>
    %cst_61 = arith.constant dense<0.000000e+00> : vector<8xf32>
    %113 = vector.multi_reduction <add>, %112, %cst_61 [1] : vector<8x32xf32> to vector<8xf32>
    %114 = vector.shape_cast %113 : vector<8xf32> to vector<8x1xf32>
    %cst_62 = arith.constant 3.200000e+01 : f32
    %115 = vector.broadcast %cst_62 : f32 to vector<8x1xf32>
    %116 = arith.divf %114, %115 : vector<8x1xf32>
    %117 = vector.broadcast %109 : vector<8x1xf32> to vector<8x32xf32>
    %118 = arith.subf %105, %117 : vector<8x32xf32>
    %cst_63 = arith.constant 9.99999974E-6 : f32
    %119 = vector.broadcast %cst_63 : f32 to vector<8x1xf32>
    %120 = arith.addf %116, %119 : vector<8x1xf32>
    %121 = math.rsqrt %120 : vector<8x1xf32>
    %122 = vector.broadcast %121 : vector<8x1xf32> to vector<8x32xf32>
    %123 = arith.mulf %118, %122 : vector<8x32xf32>
    %c0_64 = arith.constant 0 : index
    %c0_65 = arith.constant 0 : index
    %124 = vector.load %arg13[%c0_64, %c0_65] : memref<1x32xf32, #tpu.memory_space<vmem>>, vector<1x32xf32>
    %125 = vector.broadcast %124 : vector<1x32xf32> to vector<8x32xf32>
    %126 = arith.mulf %123, %125 : vector<8x32xf32>
    %c0_66 = arith.constant 0 : index
    %c0_67 = arith.constant 0 : index
    %127 = vector.load %arg14[%c0_66, %c0_67] : memref<1x32xf32, #tpu.memory_space<vmem>>, vector<1x32xf32>
    %128 = vector.broadcast %127 : vector<1x32xf32> to vector<8x32xf32>
    %129 = arith.addf %126, %128 : vector<8x32xf32>
    %c0_68 = arith.constant 0 : index
    %c0_69 = arith.constant 0 : index
    %c0_70 = arith.constant 0 : index
    %130 = vector.load %arg15[%c0_68, %c0_69, %c0_70] : memref<1x8x32xf32, #tpu.memory_space<vmem>>, vector<1x8x32xf32>
    %131 = vector.shape_cast %130 : vector<1x8x32xf32> to vector<8x32xf32>
    %132 = vector.shape_cast %129 : vector<8x32xf32> to vector<1x8x32xf32>
    tpu.vector_store %arg15[%c0_68, %c0_69, %c0_70], %132 {strides = array<i32>} : memref<1x8x32xf32, #tpu.memory_space<vmem>>, vector<1x8x32xf32>,
    return
  }
  func.func @transform_0(%arg0: i32) -> (i32, i32, i32) {
    %c0_i32 = arith.constant 0 : i32
    %c0_i32_0 = arith.constant 0 : i32
    %c0_i32_1 = arith.constant 0 : i32
    return %arg0, %c0_i32, %c0_i32_0 : i32, i32, i32
  }
  func.func @transform_1(%arg0: i32) -> (i32, i32, i32) {
    %c0_i32 = arith.constant 0 : i32
    %c0_i32_0 = arith.constant 0 : i32
    %c0_i32_1 = arith.constant 0 : i32
    return %arg0, %c0_i32, %c0_i32_0 : i32, i32, i32
  }
  func.func @transform_2(%arg0: i32) -> (i32, i32, i32) {
    %c0_i32 = arith.constant 0 : i32
    %c0_i32_0 = arith.constant 0 : i32
    %c0_i32_1 = arith.constant 0 : i32
    return %arg0, %c0_i32, %c0_i32_0 : i32, i32, i32
  }
  func.func @transform_3(%arg0: i32) -> (i32, i32, i32) {
    %c0_i32 = arith.constant 0 : i32
    %c0_i32_0 = arith.constant 0 : i32
    %c0_i32_1 = arith.constant 0 : i32
    return %arg0, %c0_i32, %c0_i32_0 : i32, i32, i32
  }
  func.func @transform_4(%arg0: i32) -> (i32, i32) {
    %c0_i32 = arith.constant 0 : i32
    %c0_i32_0 = arith.constant 0 : i32
    %c0_i32_1 = arith.constant 0 : i32
    return %c0_i32, %c0_i32_0 : i32, i32
  }
  func.func @transform_5(%arg0: i32) -> (i32, i32) {
    %c0_i32 = arith.constant 0 : i32
    %c0_i32_0 = arith.constant 0 : i32
    %c0_i32_1 = arith.constant 0 : i32
    return %c0_i32, %c0_i32_0 : i32, i32
  }
  func.func @transform_6(%arg0: i32) -> (i32, i32) {
    %c0_i32 = arith.constant 0 : i32
    %c0_i32_0 = arith.constant 0 : i32
    %c0_i32_1 = arith.constant 0 : i32
    return %c0_i32, %c0_i32_0 : i32, i32
  }
  func.func @transform_7(%arg0: i32) -> (i32, i32) {
    %c0_i32 = arith.constant 0 : i32
    %c0_i32_0 = arith.constant 0 : i32
    %c0_i32_1 = arith.constant 0 : i32
    return %c0_i32, %c0_i32_0 : i32, i32
  }
  func.func @transform_8(%arg0: i32) -> (i32, i32) {
    %c0_i32 = arith.constant 0 : i32
    %c0_i32_0 = arith.constant 0 : i32
    %c0_i32_1 = arith.constant 0 : i32
    return %c0_i32, %c0_i32_0 : i32, i32
  }
  func.func @transform_9(%arg0: i32) -> (i32, i32) {
    %c0_i32 = arith.constant 0 : i32
    %c0_i32_0 = arith.constant 0 : i32
    %c0_i32_1 = arith.constant 0 : i32
    return %c0_i32, %c0_i32_0 : i32, i32
  }
  func.func @transform_10(%arg0: i32) -> (i32, i32) {
    %c0_i32 = arith.constant 0 : i32
    %c0_i32_0 = arith.constant 0 : i32
    %c0_i32_1 = arith.constant 0 : i32
    return %c0_i32, %c0_i32_0 : i32, i32
  }
  func.func @transform_11(%arg0: i32) -> (i32, i32) {
    %c0_i32 = arith.constant 0 : i32
    %c0_i32_0 = arith.constant 0 : i32
    %c0_i32_1 = arith.constant 0 : i32
    return %c0_i32, %c0_i32_0 : i32, i32
  }
  func.func @transform_12(%arg0: i32) -> (i32, i32) {
    %c0_i32 = arith.constant 0 : i32
    %c0_i32_0 = arith.constant 0 : i32
    %c0_i32_1 = arith.constant 0 : i32
    return %c0_i32, %c0_i32_0 : i32, i32
  }
  func.func @transform_13(%arg0: i32) -> (i32, i32) {
    %c0_i32 = arith.constant 0 : i32
    %c0_i32_0 = arith.constant 0 : i32
    %c0_i32_1 = arith.constant 0 : i32
    return %c0_i32, %c0_i32_0 : i32, i32
  }
  func.func @transform_14(%arg0: i32) -> (i32, i32, i32) {
    %c0_i32 = arith.constant 0 : i32
    %c0_i32_0 = arith.constant 0 : i32
    %c0_i32_1 = arith.constant 0 : i32
    return %arg0, %c0_i32, %c0_i32_0 : i32, i32, i32
  }
  func.func @transform_15(%arg0: i32) -> (i32, i32, i32, i32) {
    %c0_i32 = arith.constant 0 : i32
    %c0_i32_0 = arith.constant 0 : i32
    %c0_i32_1 = arith.constant 0 : i32
    %c0_i32_2 = arith.constant 0 : i32
    return %arg0, %c0_i32, %c0_i32_0, %c0_i32_1 : i32, i32, i32, i32
  }
}

</mosaic_0001>

<llo_original>
// kernel: tpu_custom_call.1
$region0: #{tpu_custom_call.1}
  #allocation0 [shape = 'u32[]', space=smem, size = 0x4, offset = 0x4, fixed_abs, tag = 'smem constant byte address 0x4 - core index']
  #allocation1 [shape = 'u32[144,128]{1,0:T(1,128)}', space=vmem, size = 0x12000, scoped, tag = 'internal scratch']
  %s0 = inlined_call_operand.hbm [shape: f32[2,8,32], index: 0, kind: input, shape index: {}]
  %s1 = inlined_call_operand.hbm [shape: f32[2,8,32], index: 1, kind: input, shape index: {}]
  %s2 = inlined_call_operand.hbm [shape: f32[2,8,32], index: 2, kind: input, shape index: {}]
  %s3 = inlined_call_operand.hbm [shape: f32[2,8,8], index: 3, kind: input, shape index: {}]
  %s4 = inlined_call_operand.hbm [shape: f32[32,32], index: 4, kind: input, shape index: {}]
  %s5 = inlined_call_operand.vmem [shape: f32[1,32], index: 5, kind: input, shape index: {}]
  %s6 = inlined_call_operand.hbm [shape: f32[32,32], index: 6, kind: input, shape index: {}]
  %s7 = inlined_call_operand.vmem [shape: f32[1,32], index: 7, kind: input, shape index: {}]
  %s8 = inlined_call_operand.hbm [shape: f32[32,32], index: 8, kind: input, shape index: {}]
  %s9 = inlined_call_operand.vmem [shape: f32[1,32], index: 9, kind: input, shape index: {}]
  %s10 = inlined_call_operand.vmem [shape: f32[32,32], index: 10, kind: input, shape index: {}]
  %s11 = inlined_call_operand.vmem [shape: f32[1,32], index: 11, kind: input, shape index: {}]
  %s12 = inlined_call_operand.vmem [shape: f32[1,32], index: 12, kind: input, shape index: {}]
  %s13 = inlined_call_operand.vmem [shape: f32[1,32], index: 13, kind: input, shape index: {}]
  %s14 = inlined_call_operand.hbm [shape: f32[2,8,32], index: 14, kind: output, shape index: {0}]
  %s15 = inlined_call_operand.hbm [shape: f32[2,4,8,8], index: 15, kind: output, shape index: {1}]
  %16 = xla_tuple %s14, %s15
  %s17 = sld [smem:[#allocation0]]
  $region125: #{tpu_custom_call.1} parent=0
    _
  %s19 = ssub.s32 1, %s17
  %s20 = scalar_select 0, %s19, %s17
  $region1: #{tpu_custom_call.1} parent=0
    #allocation2 [shape = 'u8[8192]{0}', space=vmem, size = 0x2000, scoped, tag = 'input window, operand 0']
    #allocation3 [shape = 's32[2]{0}', space=sflag, size = 0x8, scoped, tag = 'scoped memory for tpu_custom_call.1']
    #allocation4 [shape = 's32[2]{0}', space=sflag, size = 0x8, scoped, tag = 'scoped memory for tpu_custom_call.1']
    #allocation5 [shape = 'u8[8192]{0}', space=vmem, size = 0x2000, scoped, tag = 'input window, operand 1']
    #allocation6 [shape = 's32[2]{0}', space=sflag, size = 0x8, scoped, tag = 'scoped memory for tpu_custom_call.1']
    #allocation7 [shape = 'u8[8192]{0}', space=vmem, size = 0x2000, scoped, tag = 'input window, operand 2']
    #allocation8 [shape = 'u8[8192]{0}', space=vmem, size = 0x2000, scoped, tag = 'input window, operand 3']
    #allocation9 [shape = 's32[2]{0}', space=sflag, size = 0x8, scoped, tag = 'scoped memory for tpu_custom_call.1']
    #allocation10 [shape = 'u8[16384]{0}', space=vmem, size = 0x4000, scoped, tag = 'input window, operand 4, single buffered']
    #allocation11 [shape = 'u8[16384]{0}', space=vmem, size = 0x4000, scoped, tag = 'input window, operand 6, single buffered']
    #allocation12 [shape = 's32[1]{0}', space=sflag, size = 0x4, scoped, tag = 'scoped memory for tpu_custom_call.1']
    #allocation13 [shape = 'u8[16384]{0}', space=vmem, size = 0x4000, scoped, tag = 'input window, operand 8, single buffered']
    #allocation14 [shape = 'u8[8192]{0}', space=vmem, size = 0x2000, scoped, tag = 'output window, operand 0']
    #allocation15 [shape = 'u8[32768]{0}', space=vmem, size = 0x8000, scoped, tag = 'output window, operand 1']
    #allocation16 [shape = 's32[2]{0}', space=sflag, size = 0x8, scoped, tag = 'scoped memory for tpu_custom_call.1']
    %21 = vsyncpa [#allocation3], 0
    %s22 = scalar_lea.sflag [#allocation3], 1
    %23 = vsyncpa %s22, 0
    %24 = vsyncpa [#allocation6], 0
    %s25 = scalar_lea.sflag [#allocation6], 1
    %26 = vsyncpa %s25, 0
    %27 = vsyncpa [#allocation9], 0
    %s28 = scalar_lea.sflag [#allocation9], 1
    %29 = vsyncpa %s28, 0
    %30 = vsyncpa [#allocation12], 0
    %31 = vsyncpa [#allocation4], 0
    %s32 = scalar_lea.sflag [#allocation4], 1
    %33 = vsyncpa %s32, 0
    %34 = vsyncpa [#allocation16], 0
    %s35 = scalar_lea.sflag [#allocation16], 1
    %36 = vsyncpa %s35, 0
    loop: start=0, step=1, limit=4
    $region2: #{tpu_custom_call.1} parent=1 // loop_pre_header
      _
    $region3: #{tpu_custom_call.1} parent=1 // loop_header
      %s38 = sphi 0, %s42
      %p39 = scmp.ge.s32.totalorder %s38, 4
      %s48 = sphi 0, %s50
      %s51 = sphi 0, %s48
      %s52 = sphi 0, %s51
      %s68 = sphi 0, %s52
      %s74 = sphi 0, %s76
      %s77 = sphi 0, %s74
      %s78 = sphi 0, %s77
      %s94 = sphi 0, %s78
      %s100 = sphi 0, %s102
      %s103 = sphi 0, %s100
      %s104 = sphi 0, %s103
      %s120 = sphi 0, %s104
      %s126 = sphi 0, %s128
      %s129 = sphi 0, %s126
      %s130 = sphi 0, %s129
      %s146 = sphi 0, %s130
      %s150 = sphi 0, %s150
      %s152 = sphi 0, %s150
      %s153 = sphi 0, %s152
      %s167 = sphi 0, %s153
      %s171 = sphi 0, %s171
      %s173 = sphi 0, %s171
      %s174 = sphi 0, %s173
      %s188 = sphi 0, %s174
      %s192 = sphi 0, %s192
      %s194 = sphi 0, %s192
      %s195 = sphi 0, %s194
      %s209 = sphi 0, %s195
      %s213 = sphi 0, %s213
      %s215 = sphi 0, %s213
      %s216 = sphi 0, %s215
      %s230 = sphi 0, %s216
      %s234 = sphi 0, %s234
      %s236 = sphi 0, %s234
      %s237 = sphi 0, %s236
      %s251 = sphi 0, %s237
      %s255 = sphi 0, %s255
      %s257 = sphi 0, %s255
      %s258 = sphi 0, %s257
      %s272 = sphi 0, %s258
      %s276 = sphi 0, %s276
      %s278 = sphi 0, %s276
      %s279 = sphi 0, %s278
      %s293 = sphi 0, %s279
      %s297 = sphi 0, %s297
      %s299 = sphi 0, %s297
      %s300 = sphi 0, %s299
      %s314 = sphi 0, %s300
      %s318 = sphi 0, %s318
      %s320 = sphi 0, %s318
      %s321 = sphi 0, %s320
      %s335 = sphi 0, %s321
      %s339 = sphi 0, %s339
      %s341 = sphi 0, %s339
      %s342 = sphi 0, %s341
      %s356 = sphi 0, %s342
      %s362 = sphi 0, %s364
      %s365 = sphi 0, %s362
      %s366 = sphi 0, %s365
      %s382 = sphi 0, %s366
      %s388 = sphi 0, %s390
      %s391 = sphi 0, %s388
      %s392 = sphi 0, %s391
      %s408 = sphi 0, %s392
    $region4: #{tpu_custom_call.1} parent=1 // loop_header_branch
      %41 = sbr.rel (%p39) target = $region8
    $region5: #{tpu_custom_call.1} parent=1 // loop_body
      %s43 = ssub.s32 %s38, 1
      %s44 = ssub.s32 %s38, 2
      %s45 = sadd.s32 %s38, 1
      %s46 = ssub.s32 %s38, %s45
      %p47 = scmp.eq.s32.totalorder %s46, 0
      %s49 = sadd.s32 %s48, 1
      %s50 = scalar_select %p47, %s48, %s49
      %p53 = pneg %p47
      %p54 = scmp.eq.s32.totalorder %s38, 1
      %p55 = por %p53, %p54
      %p56 = scmp.ne.s32.totalorder %s48, %s51
      %p57 = scmp.eq.s32.totalorder %s38, 0
      %p58 = por %p56, %p57
      %p59 = scmp.ne.s32.totalorder %s48, %s51
      %p60 = scmp.eq.s32.totalorder %s43, 1
      %p61 = por %p59, %p60
      %p62 = scmp.ne.s32.totalorder %s51, %s52
      %p63 = scmp.eq.s32.totalorder %s43, 0
      %p64 = por %p62, %p63
      %p65 = scmp.ne.s32.totalorder %s51, %s52
      %p66 = scmp.eq.s32.totalorder %s44, 1
      %p67 = por %p65, %p66
      %p69 = scmp.ne.s32.totalorder %s52, %s68
      %p70 = scmp.eq.s32.totalorder %s44, 0
      %p71 = por %p69, %p70
      %s72 = ssub.s32 %s38, %s45
      %p73 = scmp.eq.s32.totalorder %s72, 0
      %s75 = sadd.s32 %s74, 1
      %s76 = scalar_select %p73, %s74, %s75
      %p79 = pneg %p73
      %p80 = scmp.eq.s32.totalorder %s38, 1
      %p81 = por %p79, %p80
      %p82 = scmp.ne.s32.totalorder %s74, %s77
      %p83 = scmp.eq.s32.totalorder %s38, 0
      %p84 = por %p82, %p83
      %p85 = scmp.ne.s32.totalorder %s74, %s77
      %p86 = scmp.eq.s32.totalorder %s43, 1
      %p87 = por %p85, %p86
      %p88 = scmp.ne.s32.totalorder %s77, %s78
      %p89 = scmp.eq.s32.totalorder %s43, 0
      %p90 = por %p88, %p89
      %p91 = scmp.ne.s32.totalorder %s77, %s78
      %p92 = scmp.eq.s32.totalorder %s44, 1
      %p93 = por %p91, %p92
      %p95 = scmp.ne.s32.totalorder %s78, %s94
      %p96 = scmp.eq.s32.totalorder %s44, 0
      %p97 = por %p95, %p96
      %s98 = ssub.s32 %s38, %s45
      %p99 = scmp.eq.s32.totalorder %s98, 0
      %s101 = sadd.s32 %s100, 1
      %s102 = scalar_select %p99, %s100, %s101
      %p105 = pneg %p99
      %p106 = scmp.eq.s32.totalorder %s38, 1
      %p107 = por %p105, %p106
      %p108 = scmp.ne.s32.totalorder %s100, %s103
      %p109 = scmp.eq.s32.totalorder %s38, 0
      %p110 = por %p108, %p109
      %p111 = scmp.ne.s32.totalorder %s100, %s103
      %p112 = scmp.eq.s32.totalorder %s43, 1
      %p113 = por %p111, %p112
      %p114 = scmp.ne.s32.totalorder %s103, %s104
      %p115 = scmp.eq.s32.totalorder %s43, 0
      %p116 = por %p114, %p115
      %p117 = scmp.ne.s32.totalorder %s103, %s104
      %p118 = scmp.eq.s32.totalorder %s44, 1
      %p119 = por %p117, %p118
      %p121 = scmp.ne.s32.totalorder %s104, %s120
      %p122 = scmp.eq.s32.totalorder %s44, 0
      %p123 = por %p121, %p122
      %s124 = ssub.s32 %s38, %s45
      %p125 = scmp.eq.s32.totalorder %s124, 0
      %s127 = sadd.s32 %s126, 1
      %s128 = scalar_select %p125, %s126, %s127
      %p131 = pneg %p125
      %p132 = scmp.eq.s32.totalorder %s38, 1
      %p133 = por %p131, %p132
      %p134 = scmp.ne.s32.totalorder %s126, %s129
      %p135 = scmp.eq.s32.totalorder %s38, 0
      %p136 = por %p134, %p135
      %p137 = scmp.ne.s32.totalorder %s126, %s129
      %p138 = scmp.eq.s32.totalorder %s43, 1
      %p139 = por %p137, %p138
      %p140 = scmp.ne.s32.totalorder %s129, %s130
      %p141 = scmp.eq.s32.totalorder %s43, 0
      %p142 = por %p140, %p141
      %p143 = scmp.ne.s32.totalorder %s129, %s130
      %p144 = scmp.eq.s32.totalorder %s44, 1
      %p145 = por %p143, %p144
      %p147 = scmp.ne.s32.totalorder %s130, %s146
      %p148 = scmp.eq.s32.totalorder %s44, 0
      %p149 = por %p147, %p148
      %s151 = sadd.s32 %s150, 1
      %p154 = scmp.eq.s32.totalorder %s38, 1
      %p155 = scmp.ne.s32.totalorder %s150, %s152
      %p156 = scmp.eq.s32.totalorder %s38, 0
      %p157 = por %p155, %p156
      %p158 = scmp.ne.s32.totalorder %s150, %s152
      %p159 = scmp.eq.s32.totalorder %s43, 1
      %p160 = por %p158, %p159
      %p161 = scmp.ne.s32.totalorder %s152, %s153
      %p162 = scmp.eq.s32.totalorder %s43, 0
      %p163 = por %p161, %p162
      %p164 = scmp.ne.s32.totalorder %s152, %s153
      %p165 = scmp.eq.s32.totalorder %s44, 1
      %p166 = por %p164, %p165
      %p168 = scmp.ne.s32.totalorder %s153, %s167
      %p169 = scmp.eq.s32.totalorder %s44, 0
      %p170 = por %p168, %p169
      %s172 = sadd.s32 %s171, 1
      %p175 = scmp.eq.s32.totalorder %s38, 1
      %p176 = scmp.ne.s32.totalorder %s171, %s173
      %p177 = scmp.eq.s32.totalorder %s38, 0
      %p178 = por %p176, %p177
      %p179 = scmp.ne.s32.totalorder %s171, %s173
      %p180 = scmp.eq.s32.totalorder %s43, 1
      %p181 = por %p179, %p180
      %p182 = scmp.ne.s32.totalorder %s173, %s174
      %p183 = scmp.eq.s32.totalorder %s43, 0
      %p184 = por %p182, %p183
      %p185 = scmp.ne.s32.totalorder %s173, %s174
      %p186 = scmp.eq.s32.totalorder %s44, 1
      %p187 = por %p185, %p186
      %p189 = scmp.ne.s32.totalorder %s174, %s188
      %p190 = scmp.eq.s32.totalorder %s44, 0
      %p191 = por %p189, %p190
      %s193 = sadd.s32 %s192, 1
      %p196 = scmp.eq.s32.totalorder %s38, 1
      %p197 = scmp.ne.s32.totalorder %s192, %s194
      %p198 = scmp.eq.s32.totalorder %s38, 0
      %p199 = por %p197, %p198
      %p200 = scmp.ne.s32.totalorder %s192, %s194
      %p201 = scmp.eq.s32.totalorder %s43, 1
      %p202 = por %p200, %p201
      %p203 = scmp.ne.s32.totalorder %s194, %s195
      %p204 = scmp.eq.s32.totalorder %s43, 0
      %p205 = por %p203, %p204
      %p206 = scmp.ne.s32.totalorder %s194, %s195
      %p207 = scmp.eq.s32.totalorder %s44, 1
      %p208 = por %p206, %p207
      %p210 = scmp.ne.s32.totalorder %s195, %s209
      %p211 = scmp.eq.s32.totalorder %s44, 0
      %p212 = por %p210, %p211
      %s214 = sadd.s32 %s213, 1
      %p217 = scmp.eq.s32.totalorder %s38, 1
      %p218 = scmp.ne.s32.totalorder %s213, %s215
      %p219 = scmp.eq.s32.totalorder %s38, 0
      %p220 = por %p218, %p219
      %p221 = scmp.ne.s32.totalorder %s213, %s215
      %p222 = scmp.eq.s32.totalorder %s43, 1
      %p223 = por %p221, %p222
      %p224 = scmp.ne.s32.totalorder %s215, %s216
      %p225 = scmp.eq.s32.totalorder %s43, 0
      %p226 = por %p224, %p225
      %p227 = scmp.ne.s32.totalorder %s215, %s216
      %p228 = scmp.eq.s32.totalorder %s44, 1
      %p229 = por %p227, %p228
      %p231 = scmp.ne.s32.totalorder %s216, %s230
      %p232 = scmp.eq.s32.totalorder %s44, 0
      %p233 = por %p231, %p232
      %s235 = sadd.s32 %s234, 1
      %p238 = scmp.eq.s32.totalorder %s38, 1
      %p239 = scmp.ne.s32.totalorder %s234, %s236
      %p240 = scmp.eq.s32.totalorder %s38, 0
      %p241 = por %p239, %p240
      %p242 = scmp.ne.s32.totalorder %s234, %s236
      %p243 = scmp.eq.s32.totalorder %s43, 1
      %p244 = por %p242, %p243
      %p245 = scmp.ne.s32.totalorder %s236, %s237
      %p246 = scmp.eq.s32.totalorder %s43, 0
      %p247 = por %p245, %p246
      %p248 = scmp.ne.s32.totalorder %s236, %s237
      %p249 = scmp.eq.s32.totalorder %s44, 1
      %p250 = por %p248, %p249
      %p252 = scmp.ne.s32.totalorder %s237, %s251
      %p253 = scmp.eq.s32.totalorder %s44, 0
      %p254 = por %p252, %p253
      %s256 = sadd.s32 %s255, 1
      %p259 = scmp.eq.s32.totalorder %s38, 1
      %p260 = scmp.ne.s32.totalorder %s255, %s257
      %p261 = scmp.eq.s32.totalorder %s38, 0
      %p262 = por %p260, %p261
      %p263 = scmp.ne.s32.totalorder %s255, %s257
      %p264 = scmp.eq.s32.totalorder %s43, 1
      %p265 = por %p263, %p264
      %p266 = scmp.ne.s32.totalorder %s257, %s258
      %p267 = scmp.eq.s32.totalorder %s43, 0
      %p268 = por %p266, %p267
      %p269 = scmp.ne.s32.totalorder %s257, %s258
      %p270 = scmp.eq.s32.totalorder %s44, 1
      %p271 = por %p269, %p270
      %p273 = scmp.ne.s32.totalorder %s258, %s272
      %p274 = scmp.eq.s32.totalorder %s44, 0
      %p275 = por %p273, %p274
      %s277 = sadd.s32 %s276, 1
      %p280 = scmp.eq.s32.totalorder %s38, 1
      %p281 = scmp.ne.s32.totalorder %s276, %s278
      %p282 = scmp.eq.s32.totalorder %s38, 0
      %p283 = por %p281, %p282
      %p284 = scmp.ne.s32.totalorder %s276, %s278
      %p285 = scmp.eq.s32.totalorder %s43, 1
      %p286 = por %p284, %p285
      %p287 = scmp.ne.s32.totalorder %s278, %s279
      %p288 = scmp.eq.s32.totalorder %s43, 0
      %p289 = por %p287, %p288
      %p290 = scmp.ne.s32.totalorder %s278, %s279
      %p291 = scmp.eq.s32.totalorder %s44, 1
      %p292 = por %p290, %p291
      %p294 = scmp.ne.s32.totalorder %s279, %s293
      %p295 = scmp.eq.s32.totalorder %s44, 0
      %p296 = por %p294, %p295
      %s298 = sadd.s32 %s297, 1
      %p301 = scmp.eq.s32.totalorder %s38, 1
      %p302 = scmp.ne.s32.totalorder %s297, %s299
      %p303 = scmp.eq.s32.totalorder %s38, 0
      %p304 = por %p302, %p303
      %p305 = scmp.ne.s32.totalorder %s297, %s299
      %p306 = scmp.eq.s32.totalorder %s43, 1
      %p307 = por %p305, %p306
      %p308 = scmp.ne.s32.totalorder %s299, %s300
      %p309 = scmp.eq.s32.totalorder %s43, 0
      %p310 = por %p308, %p309
      %p311 = scmp.ne.s32.totalorder %s299, %s300
      %p312 = scmp.eq.s32.totalorder %s44, 1
      %p313 = por %p311, %p312
      %p315 = scmp.ne.s32.totalorder %s300, %s314
      %p316 = scmp.eq.s32.totalorder %s44, 0
      %p317 = por %p315, %p316
      %s319 = sadd.s32 %s318, 1
      %p322 = scmp.eq.s32.totalorder %s38, 1
      %p323 = scmp.ne.s32.totalorder %s318, %s320
      %p324 = scmp.eq.s32.totalorder %s38, 0
      %p325 = por %p323, %p324
      %p326 = scmp.ne.s32.totalorder %s318, %s320
      %p327 = scmp.eq.s32.totalorder %s43, 1
      %p328 = por %p326, %p327
      %p329 = scmp.ne.s32.totalorder %s320, %s321
      %p330 = scmp.eq.s32.totalorder %s43, 0
      %p331 = por %p329, %p330
      %p332 = scmp.ne.s32.totalorder %s320, %s321
      %p333 = scmp.eq.s32.totalorder %s44, 1
      %p334 = por %p332, %p333
      %p336 = scmp.ne.s32.totalorder %s321, %s335
      %p337 = scmp.eq.s32.totalorder %s44, 0
      %p338 = por %p336, %p337
      %s340 = sadd.s32 %s339, 1
      %p343 = scmp.eq.s32.totalorder %s38, 1
      %p344 = scmp.ne.s32.totalorder %s339, %s341
      %p345 = scmp.eq.s32.totalorder %s38, 0
      %p346 = por %p344, %p345
      %p347 = scmp.ne.s32.totalorder %s339, %s341
      %p348 = scmp.eq.s32.totalorder %s43, 1
      %p349 = por %p347, %p348
      %p350 = scmp.ne.s32.totalorder %s341, %s342
      %p351 = scmp.eq.s32.totalorder %s43, 0
      %p352 = por %p350, %p351
      %p353 = scmp.ne.s32.totalorder %s341, %s342
      %p354 = scmp.eq.s32.totalorder %s44, 1
      %p355 = por %p353, %p354
      %p357 = scmp.ne.s32.totalorder %s342, %s356
      %p358 = scmp.eq.s32.totalorder %s44, 0
      %p359 = por %p357, %p358
      %s360 = ssub.s32 %s38, %s45
      %p361 = scmp.eq.s32.totalorder %s360, 0
      %s363 = sadd.s32 %s362, 1
      %s364 = scalar_select %p361, %s362, %s363
      %p367 = pneg %p361
      %p368 = scmp.eq.s32.totalorder %s38, 1
      %p369 = por %p367, %p368
      %p370 = scmp.ne.s32.totalorder %s362, %s365
      %p371 = scmp.eq.s32.totalorder %s38, 0
      %p372 = por %p370, %p371
      %p373 = scmp.ne.s32.totalorder %s362, %s365
      %p374 = scmp.eq.s32.totalorder %s43, 1
      %p375 = por %p373, %p374
      %p376 = scmp.ne.s32.totalorder %s365, %s366
      %p377 = scmp.eq.s32.totalorder %s43, 0
      %p378 = por %p376, %p377
      %p379 = scmp.ne.s32.totalorder %s365, %s366
      %p380 = scmp.eq.s32.totalorder %s44, 1
      %p381 = por %p379, %p380
      %p383 = scmp.ne.s32.totalorder %s366, %s382
      %p384 = scmp.eq.s32.totalorder %s44, 0
      %p385 = por %p383, %p384
      %s386 = ssub.s32 %s38, %s45
      %p387 = scmp.eq.s32.totalorder %s386, 0
      %s389 = sadd.s32 %s388, 1
      %s390 = scalar_select %p387, %s388, %s389
      %p393 = pneg %p387
      %p394 = scmp.eq.s32.totalorder %s38, 1
      %p395 = por %p393, %p394
      %p396 = scmp.ne.s32.totalorder %s388, %s391
      %p397 = scmp.eq.s32.totalorder %s38, 0
      %p398 = por %p396, %p397
      %p399 = scmp.ne.s32.totalorder %s388, %s391
      %p400 = scmp.eq.s32.totalorder %s43, 1
      %p401 = por %p399, %p400
      %p402 = scmp.ne.s32.totalorder %s391, %s392
      %p403 = scmp.eq.s32.totalorder %s43, 0
      %p404 = por %p402, %p403
      %p405 = scmp.ne.s32.totalorder %s391, %s392
      %p406 = scmp.eq.s32.totalorder %s44, 1
      %p407 = por %p405, %p406
      %p409 = scmp.ne.s32.totalorder %s392, %s408
      %p410 = scmp.eq.s32.totalorder %s44, 0
      %p411 = por %p409, %p410
      %p412 = scmp.le.s32.totalorder 1, %s38
      %p413 = scmp.lt.s32.totalorder %s38, 3
      %p414 = pnand %p412, %p413
      %p415 = pneg %p414
      // Predicated region
      $region9: #{tpu_custom_call.1} parent=5 // pred_check
        _
      $region10: #{tpu_custom_call.1} parent=5 // pred_check_branch
        %417 = sbr.rel (%p414) target = $region12
      $region11: #{tpu_custom_call.1} parent=5 // pred_region
        %s418 = ssub.s32 %s38, 1
        // Predicated region
        $region13: #{tpu_custom_call.1} parent=11 // pred_check
          %p419 = pneg %p163
        $region14: #{tpu_custom_call.1} parent=11 // pred_check_branch
          %421 = sbr.rel (%p419) target = $region16
        $region15: #{tpu_custom_call.1} parent=11 // pred_region
          %s423 = ssub.s32 512, 512
          %424 = vsyncadd [#allocation9], %s423
          %s425 = sshll.u32 [#allocation10], 4
          %s426 = int_to_ptr.vmem [resolvable:$true] %s425
          %431 = dma.hbm_to_vmem [thread:$0]  %s4, 512, %s426, [#allocation9], 128, 128, 8
        $region16: #{tpu_custom_call.1} parent=11 // pred_fallthru
          _
        // Predicated region
        $region17: #{tpu_custom_call.1} parent=11 // pred_check
          %p432 = pneg %p184
        $region18: #{tpu_custom_call.1} parent=11 // pred_check_branch
          %434 = sbr.rel (%p432) target = $region20
        $region19: #{tpu_custom_call.1} parent=11 // pred_region
          _
        $region20: #{tpu_custom_call.1} parent=11 // pred_fallthru
          _
        // Predicated region
        $region21: #{tpu_custom_call.1} parent=11 // pred_check
          %p435 = pneg %p205
        $region22: #{tpu_custom_call.1} parent=11 // pred_check_branch
          %437 = sbr.rel (%p435) target = $region24
        $region23: #{tpu_custom_call.1} parent=11 // pred_region
          %s439 = ssub.s32 512, 512
          %440 = vsyncadd [#allocation12], %s439
          %s441 = sshll.u32 [#allocation11], 4
          %s442 = int_to_ptr.vmem [resolvable:$true] %s441
          %447 = dma.hbm_to_vmem [thread:$0]  %s6, 512, %s442, [#allocation12], 128, 128, 8
        $region24: #{tpu_custom_call.1} parent=11 // pred_fallthru
          _
        // Predicated region
        $region25: #{tpu_custom_call.1} parent=11 // pred_check
          %p448 = pneg %p226
        $region26: #{tpu_custom_call.1} parent=11 // pred_check_branch
          %450 = sbr.rel (%p448) target = $region28
        $region27: #{tpu_custom_call.1} parent=11 // pred_region
          _
        $region28: #{tpu_custom_call.1} parent=11 // pred_fallthru
          _
        // Predicated region
        $region29: #{tpu_custom_call.1} parent=11 // pred_check
          %p451 = pneg %p247
        $region30: #{tpu_custom_call.1} parent=11 // pred_check_branch
          %453 = sbr.rel (%p451) target = $region32
        $region31: #{tpu_custom_call.1} parent=11 // pred_region
          %s455 = ssub.s32 512, 512
          %456 = vsyncadd [#allocation12], %s455
          %s457 = sshll.u32 [#allocation13], 4
          %s458 = int_to_ptr.vmem [resolvable:$true] %s457
          %463 = dma.hbm_to_vmem [thread:$0]  %s8, 512, %s458, [#allocation12], 128, 128, 8
        $region32: #{tpu_custom_call.1} parent=11 // pred_fallthru
          _
        // Predicated region
        $region33: #{tpu_custom_call.1} parent=11 // pred_check
          %p464 = pneg %p268
        $region34: #{tpu_custom_call.1} parent=11 // pred_check_branch
          %466 = sbr.rel (%p464) target = $region36
        $region35: #{tpu_custom_call.1} parent=11 // pred_region
          _
        $region36: #{tpu_custom_call.1} parent=11 // pred_fallthru
          _
        // Predicated region
        $region37: #{tpu_custom_call.1} parent=11 // pred_check
          %p467 = pneg %p289
        $region38: #{tpu_custom_call.1} parent=11 // pred_check_branch
          %469 = sbr.rel (%p467) target = $region40
        $region39: #{tpu_custom_call.1} parent=11 // pred_region
          _
        $region40: #{tpu_custom_call.1} parent=11 // pred_fallthru
          _
        // Predicated region
        $region41: #{tpu_custom_call.1} parent=11 // pred_check
          %p470 = pneg %p310
        $region42: #{tpu_custom_call.1} parent=11 // pred_check_branch
          %472 = sbr.rel (%p470) target = $region44
        $region43: #{tpu_custom_call.1} parent=11 // pred_region
          _
        $region44: #{tpu_custom_call.1} parent=11 // pred_fallthru
          _
        // Predicated region
        $region45: #{tpu_custom_call.1} parent=11 // pred_check
          %p473 = pneg %p331
        $region46: #{tpu_custom_call.1} parent=11 // pred_check_branch
          %475 = sbr.rel (%p473) target = $region48
        $region47: #{tpu_custom_call.1} parent=11 // pred_region
          _
        $region48: #{tpu_custom_call.1} parent=11 // pred_fallthru
          _
        // Predicated region
        $region49: #{tpu_custom_call.1} parent=11 // pred_check
          %p476 = pneg %p352
        $region50: #{tpu_custom_call.1} parent=11 // pred_check_branch
          %478 = sbr.rel (%p476) target = $region52
        $region51: #{tpu_custom_call.1} parent=11 // pred_region
          _
        $region52: #{tpu_custom_call.1} parent=11 // pred_fallthru
          _
      $region12: #{tpu_custom_call.1} parent=5 // pred_fallthru
        _
      %p479 = scmp.lt.s32.totalorder %s38, 2
      // Predicated region
      $region53: #{tpu_custom_call.1} parent=5 // pred_check
        %p480 = pneg %p479
      $region54: #{tpu_custom_call.1} parent=5 // pred_check_branch
        %482 = sbr.rel (%p480) target = $region56
      $region55: #{tpu_custom_call.1} parent=5 // pred_region
        // Predicated region
        $region57: #{tpu_custom_call.1} parent=55 // pred_check
          %p483 = pneg %p58
        $region58: #{tpu_custom_call.1} parent=55 // pred_check_branch
          %485 = sbr.rel (%p483) target = $region60
        $region59: #{tpu_custom_call.1} parent=55 // pred_region
          %s486 = sand.u32 %s48, 1
          %s487 = scalar_lea.sflag [#allocation3], %s486
          %s488 = sand.u32 %s48, 1
          %s489 = smul.addr %s488, 8
          %s490 = scalar_lea.vmem [#allocation2], %s489
          %s492 = ssub.s32 128, 128
          %493 = vsyncadd %s487, %s492
          %s494 = smul.addr %s38, 128
          %s495 = scalar_lea.hbm %s0, %s494
          %s497 = sshll.u32 %s490, 4
          %s498 = int_to_ptr.vmem [resolvable:$true] %s497
          %500 = dma.hbm_to_vmem [thread:$0]  %s495, 128, %s498, %s487
        $region60: #{tpu_custom_call.1} parent=55 // pred_fallthru
          _
        // Predicated region
        $region61: #{tpu_custom_call.1} parent=55 // pred_check
          %p501 = pneg %p84
        $region62: #{tpu_custom_call.1} parent=55 // pred_check_branch
          %503 = sbr.rel (%p501) target = $region64
        $region63: #{tpu_custom_call.1} parent=55 // pred_region
          %s504 = sand.u32 %s38, 1
          %s505 = scalar_lea.sflag [#allocation6], %s504
          %s506 = sand.u32 %s74, 1
          %s507 = smul.addr %s506, 8
          %s508 = scalar_lea.vmem [#allocation5], %s507
          %s510 = ssub.s32 128, 128
          %511 = vsyncadd %s505, %s510
          %s512 = smul.addr %s38, 128
          %s513 = scalar_lea.hbm %s1, %s512
          %s515 = sshll.u32 %s508, 4
          %s516 = int_to_ptr.vmem [resolvable:$true] %s515
          %518 = dma.hbm_to_vmem [thread:$0]  %s513, 128, %s516, %s505
        $region64: #{tpu_custom_call.1} parent=55 // pred_fallthru
          _
        // Predicated region
        $region65: #{tpu_custom_call.1} parent=55 // pred_check
          %p519 = pneg %p110
        $region66: #{tpu_custom_call.1} parent=55 // pred_check_branch
          %521 = sbr.rel (%p519) target = $region68
        $region67: #{tpu_custom_call.1} parent=55 // pred_region
          %s522 = sand.u32 %s38, 1
          %s523 = scalar_lea.sflag [#allocation6], %s522
          %s524 = sand.u32 %s100, 1
          %s525 = smul.addr %s524, 8
          %s526 = scalar_lea.vmem [#allocation7], %s525
          %s528 = ssub.s32 128, 128
          %529 = vsyncadd %s523, %s528
          %s530 = smul.addr %s38, 128
          %s531 = scalar_lea.hbm %s2, %s530
          %s533 = sshll.u32 %s526, 4
          %s534 = int_to_ptr.vmem [resolvable:$true] %s533
          %536 = dma.hbm_to_vmem [thread:$0]  %s531, 128, %s534, %s523
        $region68: #{tpu_custom_call.1} parent=55 // pred_fallthru
          _
        // Predicated region
        $region69: #{tpu_custom_call.1} parent=55 // pred_check
          %p537 = pneg %p136
        $region70: #{tpu_custom_call.1} parent=55 // pred_check_branch
          %539 = sbr.rel (%p537) target = $region72
        $region71: #{tpu_custom_call.1} parent=55 // pred_region
          %s540 = sand.u32 %s38, 1
          %s541 = scalar_lea.sflag [#allocation9], %s540
          %s542 = sand.u32 %s126, 1
          %s543 = smul.addr %s542, 8
          %s544 = scalar_lea.vmem [#allocation8], %s543
          %s546 = ssub.s32 128, 128
          %547 = vsyncadd %s541, %s546
          %s548 = smul.addr %s38, 128
          %s549 = scalar_lea.hbm %s3, %s548
          %s551 = sshll.u32 %s544, 4
          %s552 = int_to_ptr.vmem [resolvable:$true] %s551
          %554 = dma.hbm_to_vmem [thread:$0]  %s549, 128, %s552, %s541
        $region72: #{tpu_custom_call.1} parent=55 // pred_fallthru
          _
      $region56: #{tpu_custom_call.1} parent=5 // pred_fallthru
        _
      %p555 = scmp.le.s32.totalorder 1, %s38
      %p556 = scmp.lt.s32.totalorder %s38, 3
      %p557 = pnand %p555, %p556
      %p558 = pneg %p557
      // Predicated region
      $region73: #{tpu_custom_call.1} parent=5 // pred_check
        _
      $region74: #{tpu_custom_call.1} parent=5 // pred_check_branch
        %560 = sbr.rel (%p557) target = $region76
      $region75: #{tpu_custom_call.1} parent=5 // pred_region
        %s561 = ssub.s32 %s38, 1
        %s562 = sand.u32 %s51, 1
        %s563 = scalar_lea.sflag [#allocation3], %s562
        %s564 = sand.u32 %s51, 1
        %s565 = smul.addr %s564, 8
        %s566 = scalar_lea.vmem [#allocation2], %s565
        // Predicated region
        $region77: #{tpu_custom_call.1} parent=75 // pred_check
          %p567 = pneg %p64
        $region78: #{tpu_custom_call.1} parent=75 // pred_check_branch
          %569 = sbr.rel (%p567) target = $region80
        $region79: #{tpu_custom_call.1} parent=75 // pred_region
          %570 = dma.done %s563, 128
        $region80: #{tpu_custom_call.1} parent=75 // pred_fallthru
          _
        %s571 = sand.u32 %s43, 1
        %s572 = scalar_lea.sflag [#allocation6], %s571
        %s573 = sand.u32 %s77, 1
        %s574 = smul.addr %s573, 8
        %s575 = scalar_lea.vmem [#allocation5], %s574
        // Predicated region
        $region81: #{tpu_custom_call.1} parent=75 // pred_check
          %p576 = pneg %p90
        $region82: #{tpu_custom_call.1} parent=75 // pred_check_branch
          %578 = sbr.rel (%p576) target = $region84
        $region83: #{tpu_custom_call.1} parent=75 // pred_region
          %579 = dma.done %s572, 128
        $region84: #{tpu_custom_call.1} parent=75 // pred_fallthru
          _
        %s580 = sand.u32 %s43, 1
        %s581 = scalar_lea.sflag [#allocation6], %s580
        %s582 = sand.u32 %s103, 1
        %s583 = smul.addr %s582, 8
        %s584 = scalar_lea.vmem [#allocation7], %s583
        // Predicated region
        $region85: #{tpu_custom_call.1} parent=75 // pred_check
          %p585 = pneg %p116
        $region86: #{tpu_custom_call.1} parent=75 // pred_check_branch
          %587 = sbr.rel (%p585) target = $region88
        $region87: #{tpu_custom_call.1} parent=75 // pred_region
          %588 = dma.done %s581, 128
        $region88: #{tpu_custom_call.1} parent=75 // pred_fallthru
          _
        %s589 = sand.u32 %s43, 1
        %s590 = scalar_lea.sflag [#allocation9], %s589
        %s591 = sand.u32 %s129, 1
        %s592 = smul.addr %s591, 8
        %s593 = scalar_lea.vmem [#allocation8], %s592
        // Predicated region
        $region89: #{tpu_custom_call.1} parent=75 // pred_check
          %p594 = pneg %p142
        $region90: #{tpu_custom_call.1} parent=75 // pred_check_branch
          %596 = sbr.rel (%p594) target = $region92
        $region91: #{tpu_custom_call.1} parent=75 // pred_region
          %597 = dma.done %s590, 128
        $region92: #{tpu_custom_call.1} parent=75 // pred_fallthru
          _
        // Predicated region
        $region93: #{tpu_custom_call.1} parent=75 // pred_check
          %p598 = pneg %p163
        $region94: #{tpu_custom_call.1} parent=75 // pred_check_branch
          %600 = sbr.rel (%p598) target = $region96
        $region95: #{tpu_custom_call.1} parent=75 // pred_region
          %601 = dma.done [#allocation9], 512
        $region96: #{tpu_custom_call.1} parent=75 // pred_fallthru
          _
        // Predicated region
        $region97: #{tpu_custom_call.1} parent=75 // pred_check
          %p602 = pneg %p205
        $region98: #{tpu_custom_call.1} parent=75 // pred_check_branch
          %604 = sbr.rel (%p602) target = $region100
        $region99: #{tpu_custom_call.1} parent=75 // pred_region
          %605 = dma.done [#allocation12], 512
        $region100: #{tpu_custom_call.1} parent=75 // pred_fallthru
          _
        // Predicated region
        $region101: #{tpu_custom_call.1} parent=75 // pred_check
          %p606 = pneg %p247
        $region102: #{tpu_custom_call.1} parent=75 // pred_check_branch
          %608 = sbr.rel (%p606) target = $region104
        $region103: #{tpu_custom_call.1} parent=75 // pred_region
          %609 = dma.done [#allocation12], 512
        $region104: #{tpu_custom_call.1} parent=75 // pred_fallthru
          _
        %s610 = sand.u32 %s51, 1
        %s611 = scalar_lea.sflag [#allocation3], %s610
        %s612 = sand.u32 %s51, 1
        %s613 = smul.addr %s612, 8
        %s614 = scalar_lea.vmem [#allocation2], %s613
        %p615 = pneg %p64
        %p616 = pneg %p61
        %s617 = sand.u32 %s43, 1
        %s618 = scalar_lea.sflag [#allocation6], %s617
        %s619 = sand.u32 %s77, 1
        %s620 = smul.addr %s619, 8
        %s621 = scalar_lea.vmem [#allocation5], %s620
        %p622 = pneg %p90
        %p623 = pneg %p87
        %s624 = sand.u32 %s43, 1
        %s625 = scalar_lea.sflag [#allocation6], %s624
        %s626 = sand.u32 %s103, 1
        %s627 = smul.addr %s626, 8
        %s628 = scalar_lea.vmem [#allocation7], %s627
        %p629 = pneg %p116
        %p630 = pneg %p113
        %s631 = sand.u32 %s43, 1
        %s632 = scalar_lea.sflag [#allocation9], %s631
        %s633 = sand.u32 %s129, 1
        %s634 = smul.addr %s633, 8
        %s635 = scalar_lea.vmem [#allocation8], %s634
        %p636 = pneg %p142
        %p637 = pneg %p139
        %p638 = pneg %p163
        %p639 = pneg %p160
        %p640 = pneg %p184
        %p641 = pneg %p181
        %p642 = pneg %p205
        %p643 = pneg %p202
        %p644 = pneg %p226
        %p645 = pneg %p223
        %p646 = pneg %p247
        %p647 = pneg %p244
        %p648 = pneg %p268
        %p649 = pneg %p265
        %p650 = pneg %p289
        %p651 = pneg %p286
        %p652 = pneg %p310
        %p653 = pneg %p307
        %p654 = pneg %p331
        %p655 = pneg %p328
        %p656 = pneg %p352
        %p657 = pneg %p349
        %p658 = pneg %p378
        %p659 = pneg %p375
        %s660 = sand.u32 %s365, 1
        %s661 = scalar_lea.sflag [#allocation4], %s660
        %s662 = sand.u32 %s365, 1
        %s663 = smul.addr %s662, 8
        %s664 = scalar_lea.vmem [#allocation14], %s663
        %p665 = pneg %p404
        %p666 = pneg %p401
        %s667 = sand.u32 %s391, 1
        %s668 = scalar_lea.sflag [#allocation16], %s667
        %s669 = sand.u32 %s391, 1
        %s670 = smul.addr %s669, 32
        %s671 = scalar_lea.vmem [#allocation15], %s670
        %v672 = vld [vmem:[%s566] sm:$0xff]
        %v673 = vld [vmem:[#allocation10] sm:$0xff]
        %v674 = vld [vmem:[#allocation10 + $0x8] sm:$0xff]
        %v675 = vld [vmem:[#allocation10 + $0x10] sm:$0xff]
        %v676 = vld [vmem:[#allocation10 + $0x18] sm:$0xff]
        %v677 = vld [vmem:[%s5] sm:$0x1]
        %v679 = vlaneseq
        %v680 = vshrl.u32 %v679, 7
        %v681 = vsub.s32 0, %v680
        %v682 = vrot.slane %v677, %v681
        %vm684 = vcmask 261120
        %v686 = vsel %vm684, %v672, 0
        %688 = vmatprep.subr.mxu0 0.0
        %689 = vmatpush1.msra.mxu0 %v673
        %690 = vmatprep.subr.mxu0 0.0
        %691 = vmatpush1.msra.mxu0 %v674
        %692 = vmatprep.subr.mxu0 0.0
        %693 = vmatpush1.msra.mxu0 %v675
        %694 = vmatprep.subr.mxu0 0.0
        %695 = vmatpush1.msra.mxu0 %v676
        %696 = vmatprep.subr.mxu0 0.0
        %697 = vmatpush1.msra.mxu0 0.0
        %698 = vmatprep.subr.mxu0 0.0
        %699 = vmatpush1.msra.mxu0 0.0
        %700 = vmatprep.subr.mxu0 0.0
        %701 = vmatpush1.msra.mxu0 0.0
        %702 = vmatprep.subr.mxu0 0.0
        %703 = vmatpush1.msra.mxu0 0.0
        %704 = vmatprep.subr.mxu0 0.0
        %705 = vmatpush1.msra.mxu0 0.0
        %706 = vmatprep.subr.mxu0 0.0
        %707 = vmatpush1.msra.mxu0 0.0
        %708 = vmatprep.subr.mxu0 0.0
        %709 = vmatpush1.msra.mxu0 0.0
        %710 = vmatprep.subr.mxu0 0.0
        %711 = vmatpush1.msra.mxu0 0.0
        %712 = vmatprep.subr.mxu0 0.0
        %713 = vmatpush1.msra.mxu0 0.0
        %714 = vmatprep.subr.mxu0 0.0
        %715 = vmatpush1.msra.mxu0 0.0
        %716 = vmatprep.subr.mxu0 0.0
        %717 = vmatpush1.msra.mxu0 0.0
        %718 = vmatprep.subr.mxu0 0.0
        %719 = vmatpush1.msra.mxu0 0.0
        %720 = vmatprep.subr.mxu0 0.0
        %721 = vmatpush1.msra.mxu0 0.0
        %722 = vmatprep.subr.mxu0 0.0
        %723 = vmatpush1.msra.mxu0 0.0
        %724 = vmatprep.subr.mxu0 0.0
        %725 = vmatpush1.msra.mxu0 0.0
        %726 = vmatprep.subr.mxu0 0.0
        %727 = vmatpush1.msra.mxu0 0.0
        %728 = vmatprep.subr.mxu0 0.0
        %729 = vmatpush1.msra.mxu0 0.0
        %730 = vmatprep.subr.mxu0 0.0
        %731 = vmatpush1.msra.mxu0 0.0
        %732 = vmatprep.subr.mxu0 0.0
        %733 = vmatpush1.msra.mxu0 0.0
        %734 = vmatprep.subr.mxu0 0.0
        %735 = vmatpush1.msra.mxu0 0.0
        %736 = vmatprep.subr.mxu0 0.0
        %737 = vmatpush1.msra.mxu0 0.0
        %738 = vmatprep.subr.mxu0 0.0
        %739 = vmatpush1.msra.mxu0 0.0
        %740 = vmatprep.subr.mxu0 0.0
        %741 = vmatpush1.msra.mxu0 0.0
        %742 = vmatprep.subr.mxu0 0.0
        %743 = vmatpush1.msra.mxu0 0.0
        %744 = vmatprep.subr.mxu0 0.0
        %745 = vmatpush1.msra.mxu0 0.0
        %746 = vmatprep.subr.mxu0 0.0
        %747 = vmatpush1.msra.mxu0 0.0
        %748 = vmatprep.subr.mxu0 0.0
        %749 = vmatpush1.msra.mxu0 0.0
        %750 = vmatprep.subr.mxu0 0.0
        %751 = vmatpush1.msra.mxu0 0.0
        %752 = vmatprep.mubr.f32.mxu0 0.0
        %753 = vmatmul.mubr.f32.gmra.mrb[0].mxu0 %v686
        %v754 = vpop.f32.mrb[0].mxu0
        %v755 = vadd.f32 %v682, %v754
        %v756 = vpop.f32.mrb[0].mxu0
        %757 = vdwg.mxu0
        %v758 = vld [vmem:[%s575] sm:$0xff]
        %v759 = vld [vmem:[#allocation11] sm:$0xff]
        %v760 = vld [vmem:[#allocation11 + $0x8] sm:$0xff]
        %v761 = vld [vmem:[#allocation11 + $0x10] sm:$0xff]
        %v762 = vld [vmem:[#allocation11 + $0x18] sm:$0xff]
        %v763 = vld [vmem:[%s7] sm:$0x1]
        %v765 = vlaneseq
        %v766 = vshrl.u32 %v765, 7
        %v767 = vsub.s32 0, %v766
        %v768 = vrot.slane %v763, %v767
        %v771 = vsel %vm684, %v758, 0
        %773 = vmatprep.subr.mxu0 0.0
        %774 = vmatpush1.msra.mxu0 %v759
        %775 = vmatprep.subr.mxu0 0.0
        %776 = vmatpush1.msra.mxu0 %v760
        %777 = vmatprep.subr.mxu0 0.0
        %778 = vmatpush1.msra.mxu0 %v761
        %779 = vmatprep.subr.mxu0 0.0
        %780 = vmatpush1.msra.mxu0 %v762
        %781 = vmatprep.subr.mxu0 0.0
        %782 = vmatpush1.msra.mxu0 0.0
        %783 = vmatprep.subr.mxu0 0.0
        %784 = vmatpush1.msra.mxu0 0.0
        %785 = vmatprep.subr.mxu0 0.0
        %786 = vmatpush1.msra.mxu0 0.0
        %787 = vmatprep.subr.mxu0 0.0
        %788 = vmatpush1.msra.mxu0 0.0
        %789 = vmatprep.subr.mxu0 0.0
        %790 = vmatpush1.msra.mxu0 0.0
        %791 = vmatprep.subr.mxu0 0.0
        %792 = vmatpush1.msra.mxu0 0.0
        %793 = vmatprep.subr.mxu0 0.0
        %794 = vmatpush1.msra.mxu0 0.0
        %795 = vmatprep.subr.mxu0 0.0
        %796 = vmatpush1.msra.mxu0 0.0
        %797 = vmatprep.subr.mxu0 0.0
        %798 = vmatpush1.msra.mxu0 0.0
        %799 = vmatprep.subr.mxu0 0.0
        %800 = vmatpush1.msra.mxu0 0.0
        %801 = vmatprep.subr.mxu0 0.0
        %802 = vmatpush1.msra.mxu0 0.0
        %803 = vmatprep.subr.mxu0 0.0
        %804 = vmatpush1.msra.mxu0 0.0
        %805 = vmatprep.subr.mxu0 0.0
        %806 = vmatpush1.msra.mxu0 0.0
        %807 = vmatprep.subr.mxu0 0.0
        %808 = vmatpush1.msra.mxu0 0.0
        %809 = vmatprep.subr.mxu0 0.0
        %810 = vmatpush1.msra.mxu0 0.0
        %811 = vmatprep.subr.mxu0 0.0
        %812 = vmatpush1.msra.mxu0 0.0
        %813 = vmatprep.subr.mxu0 0.0
        %814 = vmatpush1.msra.mxu0 0.0
        %815 = vmatprep.subr.mxu0 0.0
        %816 = vmatpush1.msra.mxu0 0.0
        %817 = vmatprep.subr.mxu0 0.0
        %818 = vmatpush1.msra.mxu0 0.0
        %819 = vmatprep.subr.mxu0 0.0
        %820 = vmatpush1.msra.mxu0 0.0
        %821 = vmatprep.subr.mxu0 0.0
        %822 = vmatpush1.msra.mxu0 0.0
        %823 = vmatprep.subr.mxu0 0.0
        %824 = vmatpush1.msra.mxu0 0.0
        %825 = vmatprep.subr.mxu0 0.0
        %826 = vmatpush1.msra.mxu0 0.0
        %827 = vmatprep.subr.mxu0 0.0
        %828 = vmatpush1.msra.mxu0 0.0
        %829 = vmatprep.subr.mxu0 0.0
        %830 = vmatpush1.msra.mxu0 0.0
        %831 = vmatprep.subr.mxu0 0.0
        %832 = vmatpush1.msra.mxu0 0.0
        %833 = vmatprep.subr.mxu0 0.0
        %834 = vmatpush1.msra.mxu0 0.0
        %835 = vmatprep.subr.mxu0 0.0
        %836 = vmatpush1.msra.mxu0 0.0
        %837 = vmatprep.mubr.f32.mxu0 0.0
        %838 = vmatmul.mubr.f32.gmra.mrb[0].mxu0 %v771
        %v839 = vpop.f32.mrb[0].mxu0
        %v840 = vadd.f32 %v768, %v839
        %v841 = vpop.f32.mrb[0].mxu0
        %842 = vdwg.mxu0
        %v843 = vld [vmem:[%s584] sm:$0xff]
        %v844 = vld [vmem:[#allocation13] sm:$0xff]
        %v845 = vld [vmem:[#allocation13 + $0x8] sm:$0xff]
        %v846 = vld [vmem:[#allocation13 + $0x10] sm:$0xff]
        %v847 = vld [vmem:[#allocation13 + $0x18] sm:$0xff]
        %v848 = vld [vmem:[%s9] sm:$0x1]
        %v850 = vlaneseq
        %v851 = vshrl.u32 %v850, 7
        %v852 = vsub.s32 0, %v851
        %v853 = vrot.slane %v848, %v852
        %v856 = vsel %vm684, %v843, 0
        %858 = vmatprep.subr.mxu0 0.0
        %859 = vmatpush1.msra.mxu0 %v844
        %860 = vmatprep.subr.mxu0 0.0
        %861 = vmatpush1.msra.mxu0 %v845
        %862 = vmatprep.subr.mxu0 0.0
        %863 = vmatpush1.msra.mxu0 %v846
        %864 = vmatprep.subr.mxu0 0.0
        %865 = vmatpush1.msra.mxu0 %v847
        %866 = vmatprep.subr.mxu0 0.0
        %867 = vmatpush1.msra.mxu0 0.0
        %868 = vmatprep.subr.mxu0 0.0
        %869 = vmatpush1.msra.mxu0 0.0
        %870 = vmatprep.subr.mxu0 0.0
        %871 = vmatpush1.msra.mxu0 0.0
        %872 = vmatprep.subr.mxu0 0.0
        %873 = vmatpush1.msra.mxu0 0.0
        %874 = vmatprep.subr.mxu0 0.0
        %875 = vmatpush1.msra.mxu0 0.0
        %876 = vmatprep.subr.mxu0 0.0
        %877 = vmatpush1.msra.mxu0 0.0
        %878 = vmatprep.subr.mxu0 0.0
        %879 = vmatpush1.msra.mxu0 0.0
        %880 = vmatprep.subr.mxu0 0.0
        %881 = vmatpush1.msra.mxu0 0.0
        %882 = vmatprep.subr.mxu0 0.0
        %883 = vmatpush1.msra.mxu0 0.0
        %884 = vmatprep.subr.mxu0 0.0
        %885 = vmatpush1.msra.mxu0 0.0
        %886 = vmatprep.subr.mxu0 0.0
        %887 = vmatpush1.msra.mxu0 0.0
        %888 = vmatprep.subr.mxu0 0.0
        %889 = vmatpush1.msra.mxu0 0.0
        %890 = vmatprep.subr.mxu0 0.0
        %891 = vmatpush1.msra.mxu0 0.0
        %892 = vmatprep.subr.mxu0 0.0
        %893 = vmatpush1.msra.mxu0 0.0
        %894 = vmatprep.subr.mxu0 0.0
        %895 = vmatpush1.msra.mxu0 0.0
        %896 = vmatprep.subr.mxu0 0.0
        %897 = vmatpush1.msra.mxu0 0.0
        %898 = vmatprep.subr.mxu0 0.0
        %899 = vmatpush1.msra.mxu0 0.0
        %900 = vmatprep.subr.mxu0 0.0
        %901 = vmatpush1.msra.mxu0 0.0
        %902 = vmatprep.subr.mxu0 0.0
        %903 = vmatpush1.msra.mxu0 0.0
        %904 = vmatprep.subr.mxu0 0.0
        %905 = vmatpush1.msra.mxu0 0.0
        %906 = vmatprep.subr.mxu0 0.0
        %907 = vmatpush1.msra.mxu0 0.0
        %908 = vmatprep.subr.mxu0 0.0
        %909 = vmatpush1.msra.mxu0 0.0
        %910 = vmatprep.subr.mxu0 0.0
        %911 = vmatpush1.msra.mxu0 0.0
        %912 = vmatprep.subr.mxu0 0.0
        %913 = vmatpush1.msra.mxu0 0.0
        %914 = vmatprep.subr.mxu0 0.0
        %915 = vmatpush1.msra.mxu0 0.0
        %916 = vmatprep.subr.mxu0 0.0
        %917 = vmatpush1.msra.mxu0 0.0
        %918 = vmatprep.subr.mxu0 0.0
        %919 = vmatpush1.msra.mxu0 0.0
        %920 = vmatprep.subr.mxu0 0.0
        %921 = vmatpush1.msra.mxu0 0.0
        %922 = vmatprep.mubr.f32.mxu0 0.0
        %923 = vmatmul.mubr.f32.gmra.mrb[0].mxu0 %v856
        %v924 = vpop.f32.mrb[0].mxu0
        %v925 = vadd.f32 %v853, %v924
        %v926 = vpop.f32.mrb[0].mxu0
        %927 = vdwg.mxu0
        %v928 = vld [vmem:[%s593] sm:$0xff]
        %vm929 = vcmask 64512
        %v931 = vsel %vm929, %v755, 0
        %v934 = vsel %vm929, %v840, 0
        %936 = vmatprep.subr.mxu0 0.0
        %937 = vmatpush1.xpose.msra.mxu0 %v934
        %938 = vmatprep.subr.mxu0 0.0
        %939 = vmatpush1.xpose.msra.mxu0 0.0
        %940 = vmatprep.subr.mxu0 0.0
        %941 = vmatpush1.xpose.msra.mxu0 0.0
        %942 = vmatprep.subr.mxu0 0.0
        %943 = vmatpush1.xpose.msra.mxu0 0.0
        %944 = vmatprep.subr.mxu0 0.0
        %945 = vmatpush1.xpose.msra.mxu0 0.0
        %946 = vmatprep.subr.mxu0 0.0
        %947 = vmatpush1.xpose.msra.mxu0 0.0
        %948 = vmatprep.subr.mxu0 0.0
        %949 = vmatpush1.xpose.msra.mxu0 0.0
        %950 = vmatprep.subr.mxu0 0.0
        %951 = vmatpush1.xpose.msra.mxu0 0.0
        %952 = vmatprep.subr.mxu0 0.0
        %953 = vmatpush1.xpose.msra.mxu0 0.0
        %954 = vmatprep.subr.mxu0 0.0
        %955 = vmatpush1.xpose.msra.mxu0 0.0
        %956 = vmatprep.subr.mxu0 0.0
        %957 = vmatpush1.xpose.msra.mxu0 0.0
        %958 = vmatprep.subr.mxu0 0.0
        %959 = vmatpush1.xpose.msra.mxu0 0.0
        %960 = vmatprep.subr.mxu0 0.0
        %961 = vmatpush1.xpose.msra.mxu0 0.0
        %962 = vmatprep.subr.mxu0 0.0
        %963 = vmatpush1.xpose.msra.mxu0 0.0
        %964 = vmatprep.subr.mxu0 0.0
        %965 = vmatpush1.xpose.msra.mxu0 0.0
        %966 = vmatprep.subr.mxu0 0.0
        %967 = vmatpush1.xpose.msra.mxu0 0.0
        %968 = vmatprep.subr.mxu0 0.0
        %969 = vmatpush1.xpose.msra.mxu0 0.0
        %970 = vmatprep.subr.mxu0 0.0
        %971 = vmatpush1.xpose.msra.mxu0 0.0
        %972 = vmatprep.subr.mxu0 0.0
        %973 = vmatpush1.xpose.msra.mxu0 0.0
        %974 = vmatprep.subr.mxu0 0.0
        %975 = vmatpush1.xpose.msra.mxu0 0.0
        %976 = vmatprep.subr.mxu0 0.0
        %977 = vmatpush1.xpose.msra.mxu0 0.0
        %978 = vmatprep.subr.mxu0 0.0
        %979 = vmatpush1.xpose.msra.mxu0 0.0
        %980 = vmatprep.subr.mxu0 0.0
        %981 = vmatpush1.xpose.msra.mxu0 0.0
        %982 = vmatprep.subr.mxu0 0.0
        %983 = vmatpush1.xpose.msra.mxu0 0.0
        %984 = vmatprep.subr.mxu0 0.0
        %985 = vmatpush1.xpose.msra.mxu0 0.0
        %986 = vmatprep.subr.mxu0 0.0
        %987 = vmatpush1.xpose.msra.mxu0 0.0
        %988 = vmatprep.subr.mxu0 0.0
        %989 = vmatpush1.xpose.msra.mxu0 0.0
        %990 = vmatprep.subr.mxu0 0.0
        %991 = vmatpush1.xpose.msra.mxu0 0.0
        %992 = vmatprep.subr.mxu0 0.0
        %993 = vmatpush1.xpose.msra.mxu0 0.0
        %994 = vmatprep.subr.mxu0 0.0
        %995 = vmatpush1.xpose.msra.mxu0 0.0
        %996 = vmatprep.subr.mxu0 0.0
        %997 = vmatpush1.xpose.msra.mxu0 0.0
        %998 = vmatprep.subr.mxu0 0.0
        %999 = vmatpush1.xpose.msra.mxu0 0.0
        %1000 = vmatprep.mubr.f32.mxu0 0.0
        %1001 = vmatmul.mubr.f32.gmra.mrb[0].mxu0 %v931
        %v1002 = vpop.f32.mrb[0].mxu0
        %v1003 = vadd.f32 %v928, %v1002
        %v1004 = vpop.f32.mrb[0].mxu0
        %1005 = vdwg.mxu0
        %v1006 = vsel %vm929, %v1003, -inf
        %1007 = vmax.xlane.f32.xlu0 %v1006
        %v1008 = vpop.xlane.xlu0 %1007
        %v1009 = vsub.f32 %v1003, %v1008
        %v1010 = vmul.f32 %v1009, 1.442695
        %v1011 = vpow.pop %v1010
        %v1012 = vsel %vm929, %v1011, 0.0
        %1013 = vadd.xlane.f32.xlu0 %v1012
        %v1014 = vpop.xlane.xlu0 %1013
        %v1015 = vrcp.pop %v1014
        %v1016 = vmul.f32 %v1011, %v1015
        %1017 = vst.msk [vmem:[%s671] sm:$0xff] %vm929, %v1016
        %v1019 = vsel %vm929, %v1016, 0
        %1021 = vmatprep.subr.mxu0 0.0
        %1022 = vmatpush1.msra.mxu0 %v925
        %1023 = vmatprep.subr.mxu0 0.0
        %1024 = vmatpush1.msra.mxu0 0.0
        %1025 = vmatprep.subr.mxu0 0.0
        %1026 = vmatpush1.msra.mxu0 0.0
        %1027 = vmatprep.subr.mxu0 0.0
        %1028 = vmatpush1.msra.mxu0 0.0
        %1029 = vmatprep.subr.mxu0 0.0
        %1030 = vmatpush1.msra.mxu0 0.0
        %1031 = vmatprep.subr.mxu0 0.0
        %1032 = vmatpush1.msra.mxu0 0.0
        %1033 = vmatprep.subr.mxu0 0.0
        %1034 = vmatpush1.msra.mxu0 0.0
        %1035 = vmatprep.subr.mxu0 0.0
        %1036 = vmatpush1.msra.mxu0 0.0
        %1037 = vmatprep.subr.mxu0 0.0
        %1038 = vmatpush1.msra.mxu0 0.0
        %1039 = vmatprep.subr.mxu0 0.0
        %1040 = vmatpush1.msra.mxu0 0.0
        %1041 = vmatprep.subr.mxu0 0.0
        %1042 = vmatpush1.msra.mxu0 0.0
        %1043 = vmatprep.subr.mxu0 0.0
        %1044 = vmatpush1.msra.mxu0 0.0
        %1045 = vmatprep.subr.mxu0 0.0
        %1046 = vmatpush1.msra.mxu0 0.0
        %1047 = vmatprep.subr.mxu0 0.0
        %1048 = vmatpush1.msra.mxu0 0.0
        %1049 = vmatprep.subr.mxu0 0.0
        %1050 = vmatpush1.msra.mxu0 0.0
        %1051 = vmatprep.subr.mxu0 0.0
        %1052 = vmatpush1.msra.mxu0 0.0
        %1053 = vmatprep.subr.mxu0 0.0
        %1054 = vmatpush1.msra.mxu0 0.0
        %1055 = vmatprep.subr.mxu0 0.0
        %1056 = vmatpush1.msra.mxu0 0.0
        %1057 = vmatprep.subr.mxu0 0.0
        %1058 = vmatpush1.msra.mxu0 0.0
        %1059 = vmatprep.subr.mxu0 0.0
        %1060 = vmatpush1.msra.mxu0 0.0
        %1061 = vmatprep.subr.mxu0 0.0
        %1062 = vmatpush1.msra.mxu0 0.0
        %1063 = vmatprep.subr.mxu0 0.0
        %1064 = vmatpush1.msra.mxu0 0.0
        %1065 = vmatprep.subr.mxu0 0.0
        %1066 = vmatpush1.msra.mxu0 0.0
        %1067 = vmatprep.subr.mxu0 0.0
        %1068 = vmatpush1.msra.mxu0 0.0
        %1069 = vmatprep.subr.mxu0 0.0
        %1070 = vmatpush1.msra.mxu0 0.0
        %1071 = vmatprep.subr.mxu0 0.0
        %1072 = vmatpush1.msra.mxu0 0.0
        %1073 = vmatprep.subr.mxu0 0.0
        %1074 = vmatpush1.msra.mxu0 0.0
        %1075 = vmatprep.subr.mxu0 0.0
        %1076 = vmatpush1.msra.mxu0 0.0
        %1077 = vmatprep.subr.mxu0 0.0
        %1078 = vmatpush1.msra.mxu0 0.0
        %1079 = vmatprep.subr.mxu0 0.0
        %1080 = vmatpush1.msra.mxu0 0.0
        %1081 = vmatprep.subr.mxu0 0.0
        %1082 = vmatpush1.msra.mxu0 0.0
        %1083 = vmatprep.subr.mxu0 0.0
        %1084 = vmatpush1.msra.mxu0 0.0
        %1085 = vmatprep.mubr.f32.mxu0 0.0
        %1086 = vmatmul.mubr.f32.gmra.mrb[0].mxu0 %v1019
        %v1087 = vpop.f32.mrb[0].mxu0
        %v1088 = vadd.f32 0.0, %v1087
        %v1089 = vpop.f32.mrb[0].mxu0
        %1090 = vdwg.mxu0
        %1091 = vrot.lane.b32.xlu0 %v755, 120
        %v1092 = vpop.permute.xlu0 %1091
        %1093 = vrot.lane.b32.xlu0 %v840, 120
        %v1094 = vpop.permute.xlu0 %1093
        %v1095 = vsel %vm929, %v1092, 0
        %v1097 = vsel %vm929, %v1094, 0
        %1099 = vmatprep.subr.mxu0 0.0
        %1100 = vmatpush1.xpose.msra.mxu0 %v1097
        %1101 = vmatprep.subr.mxu0 0.0
        %1102 = vmatpush1.xpose.msra.mxu0 0.0
        %1103 = vmatprep.subr.mxu0 0.0
        %1104 = vmatpush1.xpose.msra.mxu0 0.0
        %1105 = vmatprep.subr.mxu0 0.0
        %1106 = vmatpush1.xpose.msra.mxu0 0.0
        %1107 = vmatprep.subr.mxu0 0.0
        %1108 = vmatpush1.xpose.msra.mxu0 0.0
        %1109 = vmatprep.subr.mxu0 0.0
        %1110 = vmatpush1.xpose.msra.mxu0 0.0
        %1111 = vmatprep.subr.mxu0 0.0
        %1112 = vmatpush1.xpose.msra.mxu0 0.0
        %1113 = vmatprep.subr.mxu0 0.0
        %1114 = vmatpush1.xpose.msra.mxu0 0.0
        %1115 = vmatprep.subr.mxu0 0.0
        %1116 = vmatpush1.xpose.msra.mxu0 0.0
        %1117 = vmatprep.subr.mxu0 0.0
        %1118 = vmatpush1.xpose.msra.mxu0 0.0
        %1119 = vmatprep.subr.mxu0 0.0
        %1120 = vmatpush1.xpose.msra.mxu0 0.0
        %1121 = vmatprep.subr.mxu0 0.0
        %1122 = vmatpush1.xpose.msra.mxu0 0.0
        %1123 = vmatprep.subr.mxu0 0.0
        %1124 = vmatpush1.xpose.msra.mxu0 0.0
        %1125 = vmatprep.subr.mxu0 0.0
        %1126 = vmatpush1.xpose.msra.mxu0 0.0
        %1127 = vmatprep.subr.mxu0 0.0
        %1128 = vmatpush1.xpose.msra.mxu0 0.0
        %1129 = vmatprep.subr.mxu0 0.0
        %1130 = vmatpush1.xpose.msra.mxu0 0.0
        %1131 = vmatprep.subr.mxu0 0.0
        %1132 = vmatpush1.xpose.msra.mxu0 0.0
        %1133 = vmatprep.subr.mxu0 0.0
        %1134 = vmatpush1.xpose.msra.mxu0 0.0
        %1135 = vmatprep.subr.mxu0 0.0
        %1136 = vmatpush1.xpose.msra.mxu0 0.0
        %1137 = vmatprep.subr.mxu0 0.0
        %1138 = vmatpush1.xpose.msra.mxu0 0.0
        %1139 = vmatprep.subr.mxu0 0.0
        %1140 = vmatpush1.xpose.msra.mxu0 0.0
        %1141 = vmatprep.subr.mxu0 0.0
        %1142 = vmatpush1.xpose.msra.mxu0 0.0
        %1143 = vmatprep.subr.mxu0 0.0
        %1144 = vmatpush1.xpose.msra.mxu0 0.0
        %1145 = vmatprep.subr.mxu0 0.0
        %1146 = vmatpush1.xpose.msra.mxu0 0.0
        %1147 = vmatprep.subr.mxu0 0.0
        %1148 = vmatpush1.xpose.msra.mxu0 0.0
        %1149 = vmatprep.subr.mxu0 0.0
        %1150 = vmatpush1.xpose.msra.mxu0 0.0
        %1151 = vmatprep.subr.mxu0 0.0
        %1152 = vmatpush1.xpose.msra.mxu0 0.0
        %1153 = vmatprep.subr.mxu0 0.0
        %1154 = vmatpush1.xpose.msra.mxu0 0.0
        %1155 = vmatprep.subr.mxu0 0.0
        %1156 = vmatpush1.xpose.msra.mxu0 0.0
        %1157 = vmatprep.subr.mxu0 0.0
        %1158 = vmatpush1.xpose.msra.mxu0 0.0
        %1159 = vmatprep.subr.mxu0 0.0
        %1160 = vmatpush1.xpose.msra.mxu0 0.0
        %1161 = vmatprep.subr.mxu0 0.0
        %1162 = vmatpush1.xpose.msra.mxu0 0.0
        %1163 = vmatprep.mubr.f32.mxu0 0.0
        %1164 = vmatmul.mubr.f32.gmra.mrb[0].mxu0 %v1095
        %v1165 = vpop.f32.mrb[0].mxu0
        %v1166 = vadd.f32 %v928, %v1165
        %v1167 = vpop.f32.mrb[0].mxu0
        %1168 = vdwg.mxu0
        %v1169 = vsel %vm929, %v1166, -inf
        %1170 = vmax.xlane.f32.xlu0 %v1169
        %v1171 = vpop.xlane.xlu0 %1170
        %v1172 = vsub.f32 %v1166, %v1171
        %v1173 = vmul.f32 %v1172, 1.442695
        %v1174 = vpow.pop %v1173
        %v1175 = vsel %vm929, %v1174, 0.0
        %1176 = vadd.xlane.f32.xlu0 %v1175
        %v1177 = vpop.xlane.xlu0 %1176
        %v1178 = vrcp.pop %v1177
        %v1179 = vmul.f32 %v1174, %v1178
        %s1180 = scalar_lea.vmem %s671, 8 [#allocation15]
        %1181 = vst.msk [vmem:[%s1180] sm:$0xff] %vm929, %v1179
        %1183 = vrot.lane.b32.xlu0 %v925, 120
        %v1184 = vpop.permute.xlu0 %1183
        %v1187 = vsel %vm929, %v1179, 0
        %1189 = vmatprep.subr.mxu0 0.0
        %1190 = vmatpush1.msra.mxu0 %v1184
        %1191 = vmatprep.subr.mxu0 0.0
        %1192 = vmatpush1.msra.mxu0 0.0
        %1193 = vmatprep.subr.mxu0 0.0
        %1194 = vmatpush1.msra.mxu0 0.0
        %1195 = vmatprep.subr.mxu0 0.0
        %1196 = vmatpush1.msra.mxu0 0.0
        %1197 = vmatprep.subr.mxu0 0.0
        %1198 = vmatpush1.msra.mxu0 0.0
        %1199 = vmatprep.subr.mxu0 0.0
        %1200 = vmatpush1.msra.mxu0 0.0
        %1201 = vmatprep.subr.mxu0 0.0
        %1202 = vmatpush1.msra.mxu0 0.0
        %1203 = vmatprep.subr.mxu0 0.0
        %1204 = vmatpush1.msra.mxu0 0.0
        %1205 = vmatprep.subr.mxu0 0.0
        %1206 = vmatpush1.msra.mxu0 0.0
        %1207 = vmatprep.subr.mxu0 0.0
        %1208 = vmatpush1.msra.mxu0 0.0
        %1209 = vmatprep.subr.mxu0 0.0
        %1210 = vmatpush1.msra.mxu0 0.0
        %1211 = vmatprep.subr.mxu0 0.0
        %1212 = vmatpush1.msra.mxu0 0.0
        %1213 = vmatprep.subr.mxu0 0.0
        %1214 = vmatpush1.msra.mxu0 0.0
        %1215 = vmatprep.subr.mxu0 0.0
        %1216 = vmatpush1.msra.mxu0 0.0
        %1217 = vmatprep.subr.mxu0 0.0
        %1218 = vmatpush1.msra.mxu0 0.0
        %1219 = vmatprep.subr.mxu0 0.0
        %1220 = vmatpush1.msra.mxu0 0.0
        %1221 = vmatprep.subr.mxu0 0.0
        %1222 = vmatpush1.msra.mxu0 0.0
        %1223 = vmatprep.subr.mxu0 0.0
        %1224 = vmatpush1.msra.mxu0 0.0
        %1225 = vmatprep.subr.mxu0 0.0
        %1226 = vmatpush1.msra.mxu0 0.0
        %1227 = vmatprep.subr.mxu0 0.0
        %1228 = vmatpush1.msra.mxu0 0.0
        %1229 = vmatprep.subr.mxu0 0.0
        %1230 = vmatpush1.msra.mxu0 0.0
        %1231 = vmatprep.subr.mxu0 0.0
        %1232 = vmatpush1.msra.mxu0 0.0
        %1233 = vmatprep.subr.mxu0 0.0
        %1234 = vmatpush1.msra.mxu0 0.0
        %1235 = vmatprep.subr.mxu0 0.0
        %1236 = vmatpush1.msra.mxu0 0.0
        %1237 = vmatprep.subr.mxu0 0.0
        %1238 = vmatpush1.msra.mxu0 0.0
        %1239 = vmatprep.subr.mxu0 0.0
        %1240 = vmatpush1.msra.mxu0 0.0
        %1241 = vmatprep.subr.mxu0 0.0
        %1242 = vmatpush1.msra.mxu0 0.0
        %1243 = vmatprep.subr.mxu0 0.0
        %1244 = vmatpush1.msra.mxu0 0.0
        %1245 = vmatprep.subr.mxu0 0.0
        %1246 = vmatpush1.msra.mxu0 0.0
        %1247 = vmatprep.subr.mxu0 0.0
        %1248 = vmatpush1.msra.mxu0 0.0
        %1249 = vmatprep.subr.mxu0 0.0
        %1250 = vmatpush1.msra.mxu0 0.0
        %1251 = vmatprep.subr.mxu0 0.0
        %1252 = vmatpush1.msra.mxu0 0.0
        %1253 = vmatprep.mubr.f32.mxu0 0.0
        %1254 = vmatmul.mubr.f32.gmra.mrb[0].mxu0 %v1187
        %v1255 = vpop.f32.mrb[0].mxu0
        %v1256 = vadd.f32 0.0, %v1255
        %v1257 = vpop.f32.mrb[0].mxu0
        %1258 = vdwg.mxu0
        %1259 = vrot.lane.b32.xlu0 %v755, 112
        %v1260 = vpop.permute.xlu0 %1259
        %1261 = vrot.lane.b32.xlu0 %v840, 112
        %v1262 = vpop.permute.xlu0 %1261
        %v1263 = vsel %vm929, %v1260, 0
        %v1265 = vsel %vm929, %v1262, 0
        %1267 = vmatprep.subr.mxu0 0.0
        %1268 = vmatpush1.xpose.msra.mxu0 %v1265
        %1269 = vmatprep.subr.mxu0 0.0
        %1270 = vmatpush1.xpose.msra.mxu0 0.0
        %1271 = vmatprep.subr.mxu0 0.0
        %1272 = vmatpush1.xpose.msra.mxu0 0.0
        %1273 = vmatprep.subr.mxu0 0.0
        %1274 = vmatpush1.xpose.msra.mxu0 0.0
        %1275 = vmatprep.subr.mxu0 0.0
        %1276 = vmatpush1.xpose.msra.mxu0 0.0
        %1277 = vmatprep.subr.mxu0 0.0
        %1278 = vmatpush1.xpose.msra.mxu0 0.0
        %1279 = vmatprep.subr.mxu0 0.0
        %1280 = vmatpush1.xpose.msra.mxu0 0.0
        %1281 = vmatprep.subr.mxu0 0.0
        %1282 = vmatpush1.xpose.msra.mxu0 0.0
        %1283 = vmatprep.subr.mxu0 0.0
        %1284 = vmatpush1.xpose.msra.mxu0 0.0
        %1285 = vmatprep.subr.mxu0 0.0
        %1286 = vmatpush1.xpose.msra.mxu0 0.0
        %1287 = vmatprep.subr.mxu0 0.0
        %1288 = vmatpush1.xpose.msra.mxu0 0.0
        %1289 = vmatprep.subr.mxu0 0.0
        %1290 = vmatpush1.xpose.msra.mxu0 0.0
        %1291 = vmatprep.subr.mxu0 0.0
        %1292 = vmatpush1.xpose.msra.mxu0 0.0
        %1293 = vmatprep.subr.mxu0 0.0
        %1294 = vmatpush1.xpose.msra.mxu0 0.0
        %1295 = vmatprep.subr.mxu0 0.0
        %1296 = vmatpush1.xpose.msra.mxu0 0.0
        %1297 = vmatprep.subr.mxu0 0.0
        %1298 = vmatpush1.xpose.msra.mxu0 0.0
        %1299 = vmatprep.subr.mxu0 0.0
        %1300 = vmatpush1.xpose.msra.mxu0 0.0
        %1301 = vmatprep.subr.mxu0 0.0
        %1302 = vmatpush1.xpose.msra.mxu0 0.0
        %1303 = vmatprep.subr.mxu0 0.0
        %1304 = vmatpush1.xpose.msra.mxu0 0.0
        %1305 = vmatprep.subr.mxu0 0.0
        %1306 = vmatpush1.xpose.msra.mxu0 0.0
        %1307 = vmatprep.subr.mxu0 0.0
        %1308 = vmatpush1.xpose.msra.mxu0 0.0
        %1309 = vmatprep.subr.mxu0 0.0
        %1310 = vmatpush1.xpose.msra.mxu0 0.0
        %1311 = vmatprep.subr.mxu0 0.0
        %1312 = vmatpush1.xpose.msra.mxu0 0.0
        %1313 = vmatprep.subr.mxu0 0.0
        %1314 = vmatpush1.xpose.msra.mxu0 0.0
        %1315 = vmatprep.subr.mxu0 0.0
        %1316 = vmatpush1.xpose.msra.mxu0 0.0
        %1317 = vmatprep.subr.mxu0 0.0
        %1318 = vmatpush1.xpose.msra.mxu0 0.0
        %1319 = vmatprep.subr.mxu0 0.0
        %1320 = vmatpush1.xpose.msra.mxu0 0.0
        %1321 = vmatprep.subr.mxu0 0.0
        %1322 = vmatpush1.xpose.msra.mxu0 0.0
        %1323 = vmatprep.subr.mxu0 0.0
        %1324 = vmatpush1.xpose.msra.mxu0 0.0
        %1325 = vmatprep.subr.mxu0 0.0
        %1326 = vmatpush1.xpose.msra.mxu0 0.0
        %1327 = vmatprep.subr.mxu0 0.0
        %1328 = vmatpush1.xpose.msra.mxu0 0.0
        %1329 = vmatprep.subr.mxu0 0.0
        %1330 = vmatpush1.xpose.msra.mxu0 0.0
        %1331 = vmatprep.mubr.f32.mxu0 0.0
        %1332 = vmatmul.mubr.f32.gmra.mrb[0].mxu0 %v1263
        %v1333 = vpop.f32.mrb[0].mxu0
        %v1334 = vadd.f32 %v928, %v1333
        %v1335 = vpop.f32.mrb[0].mxu0
        %1336 = vdwg.mxu0
        %v1337 = vsel %vm929, %v1334, -inf
        %1338 = vmax.xlane.f32.xlu0 %v1337
        %v1339 = vpop.xlane.xlu0 %1338
        %v1340 = vsub.f32 %v1334, %v1339
        %v1341 = vmul.f32 %v1340, 1.442695
        %v1342 = vpow.pop %v1341
        %v1343 = vsel %vm929, %v1342, 0.0
        %1344 = vadd.xlane.f32.xlu0 %v1343
        %v1345 = vpop.xlane.xlu0 %1344
        %v1346 = vrcp.pop %v1345
        %v1347 = vmul.f32 %v1342, %v1346
        %s1348 = scalar_lea.vmem %s671, 16 [#allocation15]
        %1349 = vst.msk [vmem:[%s1348] sm:$0xff] %vm929, %v1347
        %1350 = vrot.lane.b32.xlu0 %v925, 112
        %v1351 = vpop.permute.xlu0 %1350
        %v1354 = vsel %vm929, %v1347, 0
        %1356 = vmatprep.subr.mxu0 0.0
        %1357 = vmatpush1.msra.mxu0 %v1351
        %1358 = vmatprep.subr.mxu0 0.0
        %1359 = vmatpush1.msra.mxu0 0.0
        %1360 = vmatprep.subr.mxu0 0.0
        %1361 = vmatpush1.msra.mxu0 0.0
        %1362 = vmatprep.subr.mxu0 0.0
        %1363 = vmatpush1.msra.mxu0 0.0
        %1364 = vmatprep.subr.mxu0 0.0
        %1365 = vmatpush1.msra.mxu0 0.0
        %1366 = vmatprep.subr.mxu0 0.0
        %1367 = vmatpush1.msra.mxu0 0.0
        %1368 = vmatprep.subr.mxu0 0.0
        %1369 = vmatpush1.msra.mxu0 0.0
        %1370 = vmatprep.subr.mxu0 0.0
        %1371 = vmatpush1.msra.mxu0 0.0
        %1372 = vmatprep.subr.mxu0 0.0
        %1373 = vmatpush1.msra.mxu0 0.0
        %1374 = vmatprep.subr.mxu0 0.0
        %1375 = vmatpush1.msra.mxu0 0.0
        %1376 = vmatprep.subr.mxu0 0.0
        %1377 = vmatpush1.msra.mxu0 0.0
        %1378 = vmatprep.subr.mxu0 0.0
        %1379 = vmatpush1.msra.mxu0 0.0
        %1380 = vmatprep.subr.mxu0 0.0
        %1381 = vmatpush1.msra.mxu0 0.0
        %1382 = vmatprep.subr.mxu0 0.0
        %1383 = vmatpush1.msra.mxu0 0.0
        %1384 = vmatprep.subr.mxu0 0.0
        %1385 = vmatpush1.msra.mxu0 0.0
        %1386 = vmatprep.subr.mxu0 0.0
        %1387 = vmatpush1.msra.mxu0 0.0
        %1388 = vmatprep.subr.mxu0 0.0
        %1389 = vmatpush1.msra.mxu0 0.0
        %1390 = vmatprep.subr.mxu0 0.0
        %1391 = vmatpush1.msra.mxu0 0.0
        %1392 = vmatprep.subr.mxu0 0.0
        %1393 = vmatpush1.msra.mxu0 0.0
        %1394 = vmatprep.subr.mxu0 0.0
        %1395 = vmatpush1.msra.mxu0 0.0
        %1396 = vmatprep.subr.mxu0 0.0
        %1397 = vmatpush1.msra.mxu0 0.0
        %1398 = vmatprep.subr.mxu0 0.0
        %1399 = vmatpush1.msra.mxu0 0.0
        %1400 = vmatprep.subr.mxu0 0.0
        %1401 = vmatpush1.msra.mxu0 0.0
        %1402 = vmatprep.subr.mxu0 0.0
        %1403 = vmatpush1.msra.mxu0 0.0
        %1404 = vmatprep.subr.mxu0 0.0
        %1405 = vmatpush1.msra.mxu0 0.0
        %1406 = vmatprep.subr.mxu0 0.0
        %1407 = vmatpush1.msra.mxu0 0.0
        %1408 = vmatprep.subr.mxu0 0.0
        %1409 = vmatpush1.msra.mxu0 0.0
        %1410 = vmatprep.subr.mxu0 0.0
        %1411 = vmatpush1.msra.mxu0 0.0
        %1412 = vmatprep.subr.mxu0 0.0
        %1413 = vmatpush1.msra.mxu0 0.0
        %1414 = vmatprep.subr.mxu0 0.0
        %1415 = vmatpush1.msra.mxu0 0.0
        %1416 = vmatprep.subr.mxu0 0.0
        %1417 = vmatpush1.msra.mxu0 0.0
        %1418 = vmatprep.subr.mxu0 0.0
        %1419 = vmatpush1.msra.mxu0 0.0
        %1420 = vmatprep.mubr.f32.mxu0 0.0
        %1421 = vmatmul.mubr.f32.gmra.mrb[0].mxu0 %v1354
        %v1422 = vpop.f32.mrb[0].mxu0
        %v1423 = vadd.f32 0.0, %v1422
        %v1424 = vpop.f32.mrb[0].mxu0
        %1425 = vdwg.mxu0
        %1426 = vrot.lane.b32.xlu0 %v755, 104
        %v1427 = vpop.permute.xlu0 %1426
        %1428 = vrot.lane.b32.xlu0 %v840, 104
        %v1429 = vpop.permute.xlu0 %1428
        %v1430 = vsel %vm929, %v1427, 0
        %v1432 = vsel %vm929, %v1429, 0
        %1434 = vmatprep.subr.mxu0 0.0
        %1435 = vmatpush1.xpose.msra.mxu0 %v1432
        %1436 = vmatprep.subr.mxu0 0.0
        %1437 = vmatpush1.xpose.msra.mxu0 0.0
        %1438 = vmatprep.subr.mxu0 0.0
        %1439 = vmatpush1.xpose.msra.mxu0 0.0
        %1440 = vmatprep.subr.mxu0 0.0
        %1441 = vmatpush1.xpose.msra.mxu0 0.0
        %1442 = vmatprep.subr.mxu0 0.0
        %1443 = vmatpush1.xpose.msra.mxu0 0.0
        %1444 = vmatprep.subr.mxu0 0.0
        %1445 = vmatpush1.xpose.msra.mxu0 0.0
        %1446 = vmatprep.subr.mxu0 0.0
        %1447 = vmatpush1.xpose.msra.mxu0 0.0
        %1448 = vmatprep.subr.mxu0 0.0
        %1449 = vmatpush1.xpose.msra.mxu0 0.0
        %1450 = vmatprep.subr.mxu0 0.0
        %1451 = vmatpush1.xpose.msra.mxu0 0.0
        %1452 = vmatprep.subr.mxu0 0.0
        %1453 = vmatpush1.xpose.msra.mxu0 0.0
        %1454 = vmatprep.subr.mxu0 0.0
        %1455 = vmatpush1.xpose.msra.mxu0 0.0
        %1456 = vmatprep.subr.mxu0 0.0
        %1457 = vmatpush1.xpose.msra.mxu0 0.0
        %1458 = vmatprep.subr.mxu0 0.0
        %1459 = vmatpush1.xpose.msra.mxu0 0.0
        %1460 = vmatprep.subr.mxu0 0.0
        %1461 = vmatpush1.xpose.msra.mxu0 0.0
        %1462 = vmatprep.subr.mxu0 0.0
        %1463 = vmatpush1.xpose.msra.mxu0 0.0
        %1464 = vmatprep.subr.mxu0 0.0
        %1465 = vmatpush1.xpose.msra.mxu0 0.0
        %1466 = vmatprep.subr.mxu0 0.0
        %1467 = vmatpush1.xpose.msra.mxu0 0.0
        %1468 = vmatprep.subr.mxu0 0.0
        %1469 = vmatpush1.xpose.msra.mxu0 0.0
        %1470 = vmatprep.subr.mxu0 0.0
        %1471 = vmatpush1.xpose.msra.mxu0 0.0
        %1472 = vmatprep.subr.mxu0 0.0
        %1473 = vmatpush1.xpose.msra.mxu0 0.0
        %1474 = vmatprep.subr.mxu0 0.0
        %1475 = vmatpush1.xpose.msra.mxu0 0.0
        %1476 = vmatprep.subr.mxu0 0.0
        %1477 = vmatpush1.xpose.msra.mxu0 0.0
        %1478 = vmatprep.subr.mxu0 0.0
        %1479 = vmatpush1.xpose.msra.mxu0 0.0
        %1480 = vmatprep.subr.mxu0 0.0
        %1481 = vmatpush1.xpose.msra.mxu0 0.0
        %1482 = vmatprep.subr.mxu0 0.0
        %1483 = vmatpush1.xpose.msra.mxu0 0.0
        %1484 = vmatprep.subr.mxu0 0.0
        %1485 = vmatpush1.xpose.msra.mxu0 0.0
        %1486 = vmatprep.subr.mxu0 0.0
        %1487 = vmatpush1.xpose.msra.mxu0 0.0
        %1488 = vmatprep.subr.mxu0 0.0
        %1489 = vmatpush1.xpose.msra.mxu0 0.0
        %1490 = vmatprep.subr.mxu0 0.0
        %1491 = vmatpush1.xpose.msra.mxu0 0.0
        %1492 = vmatprep.subr.mxu0 0.0
        %1493 = vmatpush1.xpose.msra.mxu0 0.0
        %1494 = vmatprep.subr.mxu0 0.0
        %1495 = vmatpush1.xpose.msra.mxu0 0.0
        %1496 = vmatprep.subr.mxu0 0.0
        %1497 = vmatpush1.xpose.msra.mxu0 0.0
        %1498 = vmatprep.mubr.f32.mxu0 0.0
        %1499 = vmatmul.mubr.f32.gmra.mrb[0].mxu0 %v1430
        %v1500 = vpop.f32.mrb[0].mxu0
        %v1501 = vadd.f32 %v928, %v1500
        %v1502 = vpop.f32.mrb[0].mxu0
        %1503 = vdwg.mxu0
        %v1504 = vsel %vm929, %v1501, -inf
        %1505 = vmax.xlane.f32.xlu0 %v1504
        %v1506 = vpop.xlane.xlu0 %1505
        %v1507 = vsub.f32 %v1501, %v1506
        %v1508 = vmul.f32 %v1507, 1.442695
        %v1509 = vpow.pop %v1508
        %v1510 = vsel %vm929, %v1509, 0.0
        %1511 = vadd.xlane.f32.xlu0 %v1510
        %v1512 = vpop.xlane.xlu0 %1511
        %v1513 = vrcp.pop %v1512
        %v1514 = vmul.f32 %v1509, %v1513
        %s1515 = scalar_lea.vmem %s671, 24 [#allocation15]
        %1516 = vst.msk [vmem:[%s1515] sm:$0xff] %vm929, %v1514
        %1517 = vrot.lane.b32.xlu0 %v925, 104
        %v1518 = vpop.permute.xlu0 %1517
        %v1521 = vsel %vm929, %v1514, 0
        %1523 = vmatprep.subr.mxu0 0.0
        %1524 = vmatpush1.msra.mxu0 %v1518
        %1525 = vmatprep.subr.mxu0 0.0
        %1526 = vmatpush1.msra.mxu0 0.0
        %1527 = vmatprep.subr.mxu0 0.0
        %1528 = vmatpush1.msra.mxu0 0.0
        %1529 = vmatprep.subr.mxu0 0.0
        %1530 = vmatpush1.msra.mxu0 0.0
        %1531 = vmatprep.subr.mxu0 0.0
        %1532 = vmatpush1.msra.mxu0 0.0
        %1533 = vmatprep.subr.mxu0 0.0
        %1534 = vmatpush1.msra.mxu0 0.0
        %1535 = vmatprep.subr.mxu0 0.0
        %1536 = vmatpush1.msra.mxu0 0.0
        %1537 = vmatprep.subr.mxu0 0.0
        %1538 = vmatpush1.msra.mxu0 0.0
        %1539 = vmatprep.subr.mxu0 0.0
        %1540 = vmatpush1.msra.mxu0 0.0
        %1541 = vmatprep.subr.mxu0 0.0
        %1542 = vmatpush1.msra.mxu0 0.0
        %1543 = vmatprep.subr.mxu0 0.0
        %1544 = vmatpush1.msra.mxu0 0.0
        %1545 = vmatprep.subr.mxu0 0.0
        %1546 = vmatpush1.msra.mxu0 0.0
        %1547 = vmatprep.subr.mxu0 0.0
        %1548 = vmatpush1.msra.mxu0 0.0
        %1549 = vmatprep.subr.mxu0 0.0
        %1550 = vmatpush1.msra.mxu0 0.0
        %1551 = vmatprep.subr.mxu0 0.0
        %1552 = vmatpush1.msra.mxu0 0.0
        %1553 = vmatprep.subr.mxu0 0.0
        %1554 = vmatpush1.msra.mxu0 0.0
        %1555 = vmatprep.subr.mxu0 0.0
        %1556 = vmatpush1.msra.mxu0 0.0
        %1557 = vmatprep.subr.mxu0 0.0
        %1558 = vmatpush1.msra.mxu0 0.0
        %1559 = vmatprep.subr.mxu0 0.0
        %1560 = vmatpush1.msra.mxu0 0.0
        %1561 = vmatprep.subr.mxu0 0.0
        %1562 = vmatpush1.msra.mxu0 0.0
        %1563 = vmatprep.subr.mxu0 0.0
        %1564 = vmatpush1.msra.mxu0 0.0
        %1565 = vmatprep.subr.mxu0 0.0
        %1566 = vmatpush1.msra.mxu0 0.0
        %1567 = vmatprep.subr.mxu0 0.0
        %1568 = vmatpush1.msra.mxu0 0.0
        %1569 = vmatprep.subr.mxu0 0.0
        %1570 = vmatpush1.msra.mxu0 0.0
        %1571 = vmatprep.subr.mxu0 0.0
        %1572 = vmatpush1.msra.mxu0 0.0
        %1573 = vmatprep.subr.mxu0 0.0
        %1574 = vmatpush1.msra.mxu0 0.0
        %1575 = vmatprep.subr.mxu0 0.0
        %1576 = vmatpush1.msra.mxu0 0.0
        %1577 = vmatprep.subr.mxu0 0.0
        %1578 = vmatpush1.msra.mxu0 0.0
        %1579 = vmatprep.subr.mxu0 0.0
        %1580 = vmatpush1.msra.mxu0 0.0
        %1581 = vmatprep.subr.mxu0 0.0
        %1582 = vmatpush1.msra.mxu0 0.0
        %1583 = vmatprep.subr.mxu0 0.0
        %1584 = vmatpush1.msra.mxu0 0.0
        %1585 = vmatprep.subr.mxu0 0.0
        %1586 = vmatpush1.msra.mxu0 0.0
        %1587 = vmatprep.mubr.f32.mxu0 0.0
        %1588 = vmatmul.mubr.f32.gmra.mrb[0].mxu0 %v1521
        %v1589 = vpop.f32.mrb[0].mxu0
        %v1590 = vadd.f32 0.0, %v1589
        %v1591 = vpop.f32.mrb[0].mxu0
        %1592 = vdwg.mxu0
        %1594 = vrot.lane.b32.xlu0 %v1256, 8
        %v1595 = vpop.permute.xlu0 %1594
        %1598 = vrot.lane.b32.xlu0 %v1423, 16
        %v1599 = vpop.permute.xlu0 %1598
        %1602 = vrot.lane.b32.xlu0 %v1590, 24
        %v1603 = vpop.permute.xlu0 %1602
        %v1605 = vsel %vm929, %v1088, %v1595
        %vm1606 = vcmask 130048
        %v1607 = vsel %vm1606, %v1605, %v1599
        %vm1608 = vcmask 195584
        %v1609 = vsel %vm1608, %v1607, %v1603
        %v1610 = vld [vmem:[%s10] sm:$0xff]
        %v1611 = vld [vmem:[%s10 + $0x8] sm:$0xff]
        %v1612 = vld [vmem:[%s10 + $0x10] sm:$0xff]
        %v1613 = vld [vmem:[%s10 + $0x18] sm:$0xff]
        %v1614 = vld [vmem:[%s11] sm:$0x1]
        %v1616 = vlaneseq
        %v1617 = vshrl.u32 %v1616, 7
        %v1618 = vsub.s32 0, %v1617
        %v1619 = vrot.slane %v1614, %v1618
        %v1622 = vsel %vm684, %v1609, 0
        %1624 = vmatprep.subr.mxu0 0.0
        %1625 = vmatpush1.msra.mxu0 %v1610
        %1626 = vmatprep.subr.mxu0 0.0
        %1627 = vmatpush1.msra.mxu0 %v1611
        %1628 = vmatprep.subr.mxu0 0.0
        %1629 = vmatpush1.msra.mxu0 %v1612
        %1630 = vmatprep.subr.mxu0 0.0
        %1631 = vmatpush1.msra.mxu0 %v1613
        %1632 = vmatprep.subr.mxu0 0.0
        %1633 = vmatpush1.msra.mxu0 0.0
        %1634 = vmatprep.subr.mxu0 0.0
        %1635 = vmatpush1.msra.mxu0 0.0
        %1636 = vmatprep.subr.mxu0 0.0
        %1637 = vmatpush1.msra.mxu0 0.0
        %1638 = vmatprep.subr.mxu0 0.0
        %1639 = vmatpush1.msra.mxu0 0.0
        %1640 = vmatprep.subr.mxu0 0.0
        %1641 = vmatpush1.msra.mxu0 0.0
        %1642 = vmatprep.subr.mxu0 0.0
        %1643 = vmatpush1.msra.mxu0 0.0
        %1644 = vmatprep.subr.mxu0 0.0
        %1645 = vmatpush1.msra.mxu0 0.0
        %1646 = vmatprep.subr.mxu0 0.0
        %1647 = vmatpush1.msra.mxu0 0.0
        %1648 = vmatprep.subr.mxu0 0.0
        %1649 = vmatpush1.msra.mxu0 0.0
        %1650 = vmatprep.subr.mxu0 0.0
        %1651 = vmatpush1.msra.mxu0 0.0
        %1652 = vmatprep.subr.mxu0 0.0
        %1653 = vmatpush1.msra.mxu0 0.0
        %1654 = vmatprep.subr.mxu0 0.0
        %1655 = vmatpush1.msra.mxu0 0.0
        %1656 = vmatprep.subr.mxu0 0.0
        %1657 = vmatpush1.msra.mxu0 0.0
        %1658 = vmatprep.subr.mxu0 0.0
        %1659 = vmatpush1.msra.mxu0 0.0
        %1660 = vmatprep.subr.mxu0 0.0
        %1661 = vmatpush1.msra.mxu0 0.0
        %1662 = vmatprep.subr.mxu0 0.0
        %1663 = vmatpush1.msra.mxu0 0.0
        %1664 = vmatprep.subr.mxu0 0.0
        %1665 = vmatpush1.msra.mxu0 0.0
        %1666 = vmatprep.subr.mxu0 0.0
        %1667 = vmatpush1.msra.mxu0 0.0
        %1668 = vmatprep.subr.mxu0 0.0
        %1669 = vmatpush1.msra.mxu0 0.0
        %1670 = vmatprep.subr.mxu0 0.0
        %1671 = vmatpush1.msra.mxu0 0.0
        %1672 = vmatprep.subr.mxu0 0.0
        %1673 = vmatpush1.msra.mxu0 0.0
        %1674 = vmatprep.subr.mxu0 0.0
        %1675 = vmatpush1.msra.mxu0 0.0
        %1676 = vmatprep.subr.mxu0 0.0
        %1677 = vmatpush1.msra.mxu0 0.0
        %1678 = vmatprep.subr.mxu0 0.0
        %1679 = vmatpush1.msra.mxu0 0.0
        %1680 = vmatprep.subr.mxu0 0.0
        %1681 = vmatpush1.msra.mxu0 0.0
        %1682 = vmatprep.subr.mxu0 0.0
        %1683 = vmatpush1.msra.mxu0 0.0
        %1684 = vmatprep.subr.mxu0 0.0
        %1685 = vmatpush1.msra.mxu0 0.0
        %1686 = vmatprep.subr.mxu0 0.0
        %1687 = vmatpush1.msra.mxu0 0.0
        %1688 = vmatprep.mubr.f32.mxu0 0.0
        %1689 = vmatmul.mubr.f32.gmra.mrb[0].mxu0 %v1622
        %v1690 = vpop.f32.mrb[0].mxu0
        %v1691 = vadd.f32 %v1619, %v1690
        %v1692 = vpop.f32.mrb[0].mxu0
        %1693 = vdwg.mxu0
        %v1694 = vadd.f32 %v1691, %v672
        %v1695 = vsel %vm684, %v1694, 0.0
        %1696 = vadd.xlane.f32.xlu0 %v1695
        %v1697 = vpop.xlane.xlu0 %1696
        %v1698 = vrcp.pop 32.0
        %v1699 = vmul.f32 %v1697, %v1698
        %v1700 = vsub.f32 %v1694, %v1699
        %v1701 = vmul.f32 %v1700, %v1700
        %v1702 = vsel %vm684, %v1701, 0.0
        %1703 = vadd.xlane.f32.xlu0 %v1702
        %v1704 = vpop.xlane.xlu0 %1703
        %v1705 = vmul.f32 %v1704, %v1698
        %v1706 = vadd.f32 %v1705, 1e-05
        %v1707 = vrsqrt.pop %v1706
        %v1708 = vmul.f32 %v1700, %v1707
        %v1709 = vld [vmem:[%s12] sm:$0x1]
        %v1711 = vlaneseq
        %v1712 = vshrl.u32 %v1711, 7
        %v1713 = vsub.s32 0, %v1712
        %v1714 = vrot.slane %v1709, %v1713
        %v1716 = vmul.f32 %v1708, %v1714
        %v1717 = vld [vmem:[%s13] sm:$0x1]
        %v1719 = vlaneseq
        %v1720 = vshrl.u32 %v1719, 7
        %v1721 = vsub.s32 0, %v1720
        %v1722 = vrot.slane %v1717, %v1721
        %v1724 = vadd.f32 %v1716, %v1722
        %1725 = vst.msk [vmem:[%s664] sm:$0xff] %vm684, %v1724
        %s1726 = sand.u32 %s365, 1
        %s1727 = scalar_lea.sflag [#allocation4], %s1726
        %s1728 = sand.u32 %s365, 1
        %s1729 = smul.addr %s1728, 8
        %s1730 = scalar_lea.vmem [#allocation14], %s1729
        %s1731 = sand.u32 %s391, 1
        %s1732 = scalar_lea.sflag [#allocation16], %s1731
        %s1733 = sand.u32 %s391, 1
        %s1734 = smul.addr %s1733, 32
        %s1735 = scalar_lea.vmem [#allocation15], %s1734
        // Predicated region
        $region105: #{tpu_custom_call.1} parent=75 // pred_check
          %p1736 = pneg %p375
        $region106: #{tpu_custom_call.1} parent=75 // pred_check_branch
          %1738 = sbr.rel (%p1736) target = $region108
        $region107: #{tpu_custom_call.1} parent=75 // pred_region
          %s1740 = ssub.s32 128, 128
          %1741 = vsyncadd %s1727, %s1740
          %s1742 = smul.addr %s43, 128
          %s1743 = scalar_lea.hbm %s14, %s1742
          %s1745 = sshll.u32 %s1730, 4
          %s1746 = int_to_ptr.vmem [resolvable:$true] %s1745
          %1748 = dma.vmem_to_hbm [thread:$0]  %s1746, 128, %s1743, %s1727
        $region108: #{tpu_custom_call.1} parent=75 // pred_fallthru
          _
        // Predicated region
        $region109: #{tpu_custom_call.1} parent=75 // pred_check
          %p1749 = pneg %p401
        $region110: #{tpu_custom_call.1} parent=75 // pred_check_branch
          %1751 = sbr.rel (%p1749) target = $region112
        $region111: #{tpu_custom_call.1} parent=75 // pred_region
          %s1753 = ssub.s32 512, 512
          %1754 = vsyncadd %s1732, %s1753
          %s1755 = smul.addr %s43, 4
          %s1756 = smul.addr %s1755, 128
          %s1757 = scalar_lea.hbm %s15, %s1756
          %s1758 = sshll.u32 %s1735, 4
          %s1759 = int_to_ptr.vmem [resolvable:$true] %s1758
          %1764 = dma.vmem_to_hbm [thread:$0]  %s1759, 512, %s1757, %s1732, 128, 128, 8
        $region112: #{tpu_custom_call.1} parent=75 // pred_fallthru
          _
      $region76: #{tpu_custom_call.1} parent=5 // pred_fallthru
        _
      %p1765 = scmp.le.s32.totalorder 2, %s38
      // Predicated region
      $region113: #{tpu_custom_call.1} parent=5 // pred_check
        %p1766 = pneg %p1765
      $region114: #{tpu_custom_call.1} parent=5 // pred_check_branch
        %1768 = sbr.rel (%p1766) target = $region116
      $region115: #{tpu_custom_call.1} parent=5 // pred_region
        %s1769 = ssub.s32 %s38, 2
        // Predicated region
        $region117: #{tpu_custom_call.1} parent=115 // pred_check
          %p1770 = pneg %p381
        $region118: #{tpu_custom_call.1} parent=115 // pred_check_branch
          %1772 = sbr.rel (%p1770) target = $region120
        $region119: #{tpu_custom_call.1} parent=115 // pred_region
          %s1773 = sand.u32 %s366, 1
          %s1774 = scalar_lea.sflag [#allocation4], %s1773
          %s1775 = sand.u32 %s366, 1
          %s1776 = smul.addr %s1775, 8
          %s1777 = scalar_lea.vmem [#allocation14], %s1776
          %1778 = dma.done %s1774, 128
        $region120: #{tpu_custom_call.1} parent=115 // pred_fallthru
          _
        // Predicated region
        $region121: #{tpu_custom_call.1} parent=115 // pred_check
          %p1779 = pneg %p407
        $region122: #{tpu_custom_call.1} parent=115 // pred_check_branch
          %1781 = sbr.rel (%p1779) target = $region124
        $region123: #{tpu_custom_call.1} parent=115 // pred_region
          %s1782 = sand.u32 %s392, 1
          %s1783 = scalar_lea.sflag [#allocation16], %s1782
          %s1784 = sand.u32 %s392, 1
          %s1785 = smul.addr %s1784, 32
          %s1786 = scalar_lea.vmem [#allocation15], %s1785
          %1787 = dma.done %s1783, 512
        $region124: #{tpu_custom_call.1} parent=115 // pred_fallthru
          _
      $region116: #{tpu_custom_call.1} parent=5 // pred_fallthru
        _
    $region6: #{tpu_custom_call.1} parent=1 // loop_footer
      %s42 = sadd.s32 1, %s38
    $region7: #{tpu_custom_call.1} parent=1 // loop_footer_branch
      %37 = sbr.rel target = $region3
    $region8: #{tpu_custom_call.1} parent=1 // loop_exit
      _
    %1788 = vsyncpa [#allocation3], 1
    %s1789 = scalar_lea.sflag [#allocation3], 1
    %1790 = vsyncpa %s1789, 1
    %1791 = vsyncpa [#allocation6], 1
    %s1792 = scalar_lea.sflag [#allocation6], 1
    %1793 = vsyncpa %s1792, 1
    %1794 = vsyncpa [#allocation9], 1
    %s1795 = scalar_lea.sflag [#allocation9], 1
    %1796 = vsyncpa %s1795, 1
    %1797 = vsyncpa [#allocation12], 1
    %1798 = vsyncpa [#allocation4], 1
    %s1799 = scalar_lea.sflag [#allocation4], 1
    %1800 = vsyncpa %s1799, 1
    %1801 = vsyncpa [#allocation16], 1
    %s1802 = scalar_lea.sflag [#allocation16], 1
    %1803 = vsyncpa %s1802, 1

</llo_original>
